<compile_context>
chip_gen: v5e
topology: v5e:2x2
jax: 0.10.0
libtpu: 0.0.40
codegen_flags: <defaults>
</compile_context>

<pallas_src>
import functools
import math

import jax
import jax.numpy as jnp
from jax.experimental import pallas as pl
from jax.experimental.pallas import tpu as pltpu


# ----------------------------- config ------------------------------------- #
class Cfg:
    vocab_size = 64
    seq_len = 8
    d_model = 32
    n_heads = 4
    n_layers = 2
    reward_num_labels = 2


# --------------------------- kernel helpers -------------------------------- #
def _layernorm(x, g, b, eps=1e-5):
    mu = jnp.mean(x, axis=-1, keepdims=True)
    var = jnp.mean((x - mu) ** 2, axis=-1, keepdims=True)
    return (x - mu) * jax.lax.rsqrt(var + eps) * g + b


# ------------------------ fused forward-pass kernel ------------------------ #
def reward_forward_kernel(
    x_ref, mask_ref, sel_ref,
    ln1g_ref, ln1b_ref,
    wqkv_ref, bqkv_ref, wo_ref, bo_ref,
    ln2g_ref, ln2b_ref, w1_ref, b1_ref, w2_ref, b2_ref,
    lnfg_ref, lnfb_ref, wh_ref, bh_ref,
    o_ref,
    *, n_layers, n_heads, seq_len,
):
    BT, D = x_ref.shape
    T = seq_len
    B = BT // T
    H = n_heads
    Dh = D // H

    x = x_ref[...]                          # (BT, D), flattened by the wrapper
    mask_b = mask_ref[...][None, :, :]      # hoisted: one broadcast for all layers

    for l in range(n_layers):               # static unrolled layer loop
        # ------------------- self-attention (pre-LN) ------------------- #
        xln = _layernorm(x, ln1g_ref[l], ln1b_ref[l])

        # ONE fused QKV matmul per layer (1/sqrt(Dh) already folded into Q).
        qkv = jnp.dot(xln, wqkv_ref[l], preferred_element_type=jnp.float32) + bqkv_ref[l]

        # Fold batch+head into one leading axis of size H*B (= 8 sublanes):
        # static lane slices + leading-axis concat, no 4-D transposes.
        def gather_heads(base):
            return jnp.concatenate(
                [qkv[:, base + h * Dh: base + (h + 1) * Dh].reshape(B, T, Dh)
                 for h in range(H)],
                axis=0)                                     # (H*B, T, Dh)

        q = gather_heads(0)
        k = gather_heads(D)
        v = gather_heads(2 * D)

        # ONE score einsum + ONE masked softmax + ONE context einsum per layer.
        s = jnp.einsum('nqd,nkd->nqk', q, k, preferred_element_type=jnp.float32)
        s = s + mask_b
        s = s - jnp.max(s, axis=-1, keepdims=True)
        p = jnp.exp(s)
        p = p * pl.reciprocal(jnp.sum(p, axis=-1, keepdims=True), approx=True)
        ctx = jnp.einsum('nqk,nkd->nqd', p, v, preferred_element_type=jnp.float32)

        # Merge heads back to (BT, D) by lane-concat, then ONE output projection.
        attn = jnp.concatenate(
            [ctx[h * B:(h + 1) * B].reshape(BT, Dh) for h in range(H)], axis=-1)
        x = x + jnp.dot(attn, wo_ref[l], preferred_element_type=jnp.float32) + bo_ref[l]

        # --------------------------- MLP (pre-LN) ----------------------- #
        xln2 = _layernorm(x, ln2g_ref[l], ln2b_ref[l])
        h1 = jnp.dot(xln2, w1_ref[l], preferred_element_type=jnp.float32) + b1_ref[l]
        # TODO(synk): PyTorch nn.GELU default is exact erf; using tanh approximation here.
        h1 = jax.nn.gelu(h1, approximate=True)
        x = x + jnp.dot(h1, w2_ref[l], preferred_element_type=jnp.float32) + b2_ref[l]

    # ---- last-position select (one tiny MXU push) + final LN + reward head ----
    last = jnp.dot(sel_ref[...], x, preferred_element_type=jnp.float32)     # (B, D)
    last = _layernorm(last, lnfg_ref[...], lnfb_ref[...])
    o_ref[...] = (jnp.dot(last, wh_ref[...], preferred_element_type=jnp.float32)
                  + bh_ref[...])


# ------------------------------ params ------------------------------------- #
def init_params(key, cfg: Cfg):
    L, D, H = cfg.n_layers, cfg.d_model, cfg.n_heads
    Dh = D // H
    H4 = 4 * D
    scale = 1.0 / math.sqrt(Dh)

    def nrm(k, shape, std=0.02):
        return (std * jax.random.normal(k, shape)).astype(jnp.float32)

    keys = iter(jax.random.split(key, 16))

    # Fused QKV weight per layer (Linear(D, 3D)); fold the 1/sqrt(Dh) score
    # scale into the Q slice ONCE here so the kernel never multiplies scores.
    w_qkv = nrm(next(keys), (L, D, 3 * D))
    b_qkv = jnp.zeros((L, 1, 3 * D), jnp.float32)
    w_qkv = w_qkv.at[:, :, 0:D].multiply(scale)
    b_qkv = b_qkv.at[:, :, 0:D].multiply(scale)

    params = {
        "tok_emb": nrm(next(keys), (cfg.vocab_size, D)),
        "pos_emb": nrm(next(keys), (cfg.seq_len, D)),
        # stacked transformer-block params (leading L axis)
        "ln1_g": jnp.ones((L, 1, D), jnp.float32),
        "ln1_b": jnp.zeros((L, 1, D), jnp.float32),
        "w_qkv": w_qkv,
        "b_qkv": b_qkv,
        "w_o": nrm(next(keys), (L, D, D)),
        "b_o": jnp.zeros((L, 1, D), jnp.float32),
        "ln2_g": jnp.ones((L, 1, D), jnp.float32),
        "ln2_b": jnp.zeros((L, 1, D), jnp.float32),
        "w_1": nrm(next(keys), (L, D, H4)),
        "b_1": jnp.zeros((L, 1, H4), jnp.float32),
        "w_2": nrm(next(keys), (L, H4, D)),
        "b_2": jnp.zeros((L, 1, D), jnp.float32),
        # final LN + replaced reward head: Linear(D, reward_num_labels)
        "lnf_g": jnp.ones((1, D), jnp.float32),
        "lnf_b": jnp.zeros((1, D), jnp.float32),
        "w_head": nrm(next(keys), (D, cfg.reward_num_labels)),
        "b_head": jnp.zeros((1, cfg.reward_num_labels), jnp.float32),
    }
    return params


# ------------------------------ forward ------------------------------------ #
def reward_model_forward(ids, params, cfg: Cfg, mask=None):
    """ids: (B, T) int32 token ids; mask: optional (T, T) additive attention mask."""
    B, T = ids.shape
    D = cfg.d_model

    # embedding gather + flatten kept in plain JAX (glue / free layout change)
    x = jnp.take(params["tok_emb"], ids, axis=0) + params["pos_emb"][:T]   # (B, T, D)
    x = x.reshape(B * T, D)                                                # (BT, D)

    if mask is None:
        causal = jnp.tril(jnp.ones((T, T), dtype=bool))
        mask = jnp.where(causal, 0.0, -1e9).astype(jnp.float32)

    # one-hot selector of the last position of every sequence (rows T-1, 2T-1, ...)
    sel = jax.nn.one_hot(jnp.arange(B) * T + (T - 1), B * T, dtype=jnp.float32)

    kernel = functools.partial(reward_forward_kernel,
                               n_layers=cfg.n_layers, n_heads=cfg.n_heads, seq_len=T)

    args = (x, mask, sel,
            params["ln1_g"], params["ln1_b"],
            params["w_qkv"], params["b_qkv"],
            params["w_o"], params["b_o"],
            params["ln2_g"], params["ln2_b"],
            params["w_1"], params["b_1"], params["w_2"], params["b_2"],
            params["lnf_g"], params["lnf_b"],
            params["w_head"], params["b_head"])

    in_specs = [pl.BlockSpec(memory_space=pltpu.MemorySpace.VMEM) for _ in args]
    out_specs = pl.BlockSpec(memory_space=pltpu.MemorySpace.VMEM)

    return pl.pallas_call(
        kernel,
        out_shape=jax.ShapeDtypeStruct((B, cfg.reward_num_labels), jnp.float32),
        in_specs=in_specs,
        out_specs=out_specs,
    )(*args)


# -------------------------------- main -------------------------------------- #
if __name__ == "__main__":
    cfg = Cfg()
    key = jax.random.PRNGKey(0)
    k_param, k_ids = jax.random.split(key)

    params = init_params(k_param, cfg)
    ids = jax.random.randint(k_ids, (2, cfg.seq_len), 0, cfg.vocab_size, dtype=jnp.int32)

    out = reward_model_forward(ids, params, cfg)
    out = jax.block_until_ready(out)

    assert out.shape == (2, cfg.reward_num_labels), out.shape
    assert bool(jnp.all(jnp.isfinite(out)))
    print("KERNEL_OK")
</pallas_src>

<mosaic_0001>
module attributes {stable_mosaic.version = 11 : i64} {
  func.func @reward_forward_kernel(%arg0: memref<16x32xf32, #tpu.memory_space<vmem>>, %arg1: memref<8x8xf32, #tpu.memory_space<vmem>>, %arg2: memref<2x16xf32, #tpu.memory_space<vmem>>, %arg3: memref<2x1x32xf32, #tpu.memory_space<vmem>>, %arg4: memref<2x1x32xf32, #tpu.memory_space<vmem>>, %arg5: memref<2x32x96xf32, #tpu.memory_space<vmem>>, %arg6: memref<2x1x96xf32, #tpu.memory_space<vmem>>, %arg7: memref<2x32x32xf32, #tpu.memory_space<vmem>>, %arg8: memref<2x1x32xf32, #tpu.memory_space<vmem>>, %arg9: memref<2x1x32xf32, #tpu.memory_space<vmem>>, %arg10: memref<2x1x32xf32, #tpu.memory_space<vmem>>, %arg11: memref<2x32x128xf32, #tpu.memory_space<vmem>>, %arg12: memref<2x1x128xf32, #tpu.memory_space<vmem>>, %arg13: memref<2x128x32xf32, #tpu.memory_space<vmem>>, %arg14: memref<2x1x32xf32, #tpu.memory_space<vmem>>, %arg15: memref<1x32xf32, #tpu.memory_space<vmem>>, %arg16: memref<1x32xf32, #tpu.memory_space<vmem>>, %arg17: memref<32x2xf32, #tpu.memory_space<vmem>>, %arg18: memref<1x2xf32, #tpu.memory_space<vmem>>, %arg19: memref<2x2xf32, #tpu.memory_space<vmem>>) attributes {dimension_semantics = [], scalar_prefetch = 0 : i64, scratch_operands = 0 : i64, tpu.core_type = #tpu.core_type<tc>} {
    %c0 = arith.constant 0 : index
    %c0_0 = arith.constant 0 : index
    %0 = vector.load %arg0[%c0, %c0_0] : memref<16x32xf32, #tpu.memory_space<vmem>>, vector<16x32xf32>
    %c0_1 = arith.constant 0 : index
    %c0_2 = arith.constant 0 : index
    %1 = vector.load %arg1[%c0_1, %c0_2] : memref<8x8xf32, #tpu.memory_space<vmem>>, vector<8x8xf32>
    %2 = vector.shape_cast %1 : vector<8x8xf32> to vector<1x8x8xf32>
    %c0_3 = arith.constant 0 : index
    %c0_4 = arith.constant 0 : index
    %c0_5 = arith.constant 0 : index
    %3 = vector.load %arg3[%c0_3, %c0_4, %c0_5] : memref<2x1x32xf32, #tpu.memory_space<vmem>>, vector<1x1x32xf32>
    %4 = vector.shape_cast %3 : vector<1x1x32xf32> to vector<1x32xf32>
    %c0_6 = arith.constant 0 : index
    %c0_7 = arith.constant 0 : index
    %c0_8 = arith.constant 0 : index
    %5 = vector.load %arg4[%c0_6, %c0_7, %c0_8] : memref<2x1x32xf32, #tpu.memory_space<vmem>>, vector<1x1x32xf32>
    %6 = vector.shape_cast %5 : vector<1x1x32xf32> to vector<1x32xf32>
    %cst = arith.constant dense<0.000000e+00> : vector<16xf32>
    %7 = vector.multi_reduction <add>, %0, %cst [1] : vector<16x32xf32> to vector<16xf32>
    %8 = vector.shape_cast %7 : vector<16xf32> to vector<16x1xf32>
    %cst_9 = arith.constant 3.200000e+01 : f32
    %9 = vector.broadcast %cst_9 : f32 to vector<16x1xf32>
    %10 = arith.divf %8, %9 : vector<16x1xf32>
    %11 = vector.broadcast %10 : vector<16x1xf32> to vector<16x32xf32>
    %12 = arith.subf %0, %11 : vector<16x32xf32>
    %13 = arith.mulf %12, %12 : vector<16x32xf32>
    %cst_10 = arith.constant dense<0.000000e+00> : vector<16xf32>
    %14 = vector.multi_reduction <add>, %13, %cst_10 [1] : vector<16x32xf32> to vector<16xf32>
    %15 = vector.shape_cast %14 : vector<16xf32> to vector<16x1xf32>
    %cst_11 = arith.constant 3.200000e+01 : f32
    %16 = vector.broadcast %cst_11 : f32 to vector<16x1xf32>
    %17 = arith.divf %15, %16 : vector<16x1xf32>
    %18 = vector.broadcast %10 : vector<16x1xf32> to vector<16x32xf32>
    %19 = arith.subf %0, %18 : vector<16x32xf32>
    %cst_12 = arith.constant 9.99999974E-6 : f32
    %20 = vector.broadcast %cst_12 : f32 to vector<16x1xf32>
    %21 = arith.addf %17, %20 : vector<16x1xf32>
    %22 = math.rsqrt %21 : vector<16x1xf32>
    %23 = vector.broadcast %22 : vector<16x1xf32> to vector<16x32xf32>
    %24 = arith.mulf %19, %23 : vector<16x32xf32>
    %25 = vector.broadcast %4 : vector<1x32xf32> to vector<16x32xf32>
    %26 = arith.mulf %24, %25 : vector<16x32xf32>
    %27 = vector.broadcast %6 : vector<1x32xf32> to vector<16x32xf32>
    %28 = arith.addf %26, %27 : vector<16x32xf32>
    %c0_13 = arith.constant 0 : index
    %c0_14 = arith.constant 0 : index
    %c0_15 = arith.constant 0 : index
    %29 = vector.load %arg5[%c0_13, %c0_14, %c0_15] : memref<2x32x96xf32, #tpu.memory_space<vmem>>, vector<1x32x96xf32>
    %30 = vector.shape_cast %29 : vector<1x32x96xf32> to vector<32x96xf32>
    %cst_16 = arith.constant dense<0.000000e+00> : vector<16x96xf32>
    %31 = tpu.matmul %28, %30, %cst_16 {dimension_numbers = #tpu.dot_dimension_numbers<[1], [0], [0], [1], [0, 0, 1, 1], [], []>} : vector<16x32xf32>, vector<32x96xf32>, vector<16x96xf32> -> vector<16x96xf32>
    %c0_17 = arith.constant 0 : index
    %c0_18 = arith.constant 0 : index
    %c0_19 = arith.constant 0 : index
    %32 = vector.load %arg6[%c0_17, %c0_18, %c0_19] : memref<2x1x96xf32, #tpu.memory_space<vmem>>, vector<1x1x96xf32>
    %33 = vector.shape_cast %32 : vector<1x1x96xf32> to vector<1x96xf32>
    %34 = vector.broadcast %33 : vector<1x96xf32> to vector<16x96xf32>
    %35 = arith.addf %31, %34 : vector<16x96xf32>
    %36 = vector.extract_strided_slice %35 {offsets = [0, 0], sizes = [16, 8], strides = [1, 1]} : vector<16x96xf32> to vector<16x8xf32>
    %37 = vector.shape_cast %36 : vector<16x8xf32> to vector<2x8x8xf32>
    %38 = vector.extract_strided_slice %35 {offsets = [0, 8], sizes = [16, 8], strides = [1, 1]} : vector<16x96xf32> to vector<16x8xf32>
    %39 = vector.shape_cast %38 : vector<16x8xf32> to vector<2x8x8xf32>
    %40 = vector.extract_strided_slice %35 {offsets = [0, 16], sizes = [16, 8], strides = [1, 1]} : vector<16x96xf32> to vector<16x8xf32>
    %41 = vector.shape_cast %40 : vector<16x8xf32> to vector<2x8x8xf32>
    %42 = vector.extract_strided_slice %35 {offsets = [0, 24], sizes = [16, 8], strides = [1, 1]} : vector<16x96xf32> to vector<16x8xf32>
    %43 = vector.shape_cast %42 : vector<16x8xf32> to vector<2x8x8xf32>
    %44 = tpu.concatenate %37, %39, %41, %43 in 0 : vector<2x8x8xf32>, vector<2x8x8xf32>, vector<2x8x8xf32>, vector<2x8x8xf32> -> vector<8x8x8xf32>
    %45 = vector.extract_strided_slice %35 {offsets = [0, 32], sizes = [16, 8], strides = [1, 1]} : vector<16x96xf32> to vector<16x8xf32>
    %46 = vector.shape_cast %45 : vector<16x8xf32> to vector<2x8x8xf32>
    %47 = vector.extract_strided_slice %35 {offsets = [0, 40], sizes = [16, 8], strides = [1, 1]} : vector<16x96xf32> to vector<16x8xf32>
    %48 = vector.shape_cast %47 : vector<16x8xf32> to vector<2x8x8xf32>
    %49 = vector.extract_strided_slice %35 {offsets = [0, 48], sizes = [16, 8], strides = [1, 1]} : vector<16x96xf32> to vector<16x8xf32>
    %50 = vector.shape_cast %49 : vector<16x8xf32> to vector<2x8x8xf32>
    %51 = vector.extract_strided_slice %35 {offsets = [0, 56], sizes = [16, 8], strides = [1, 1]} : vector<16x96xf32> to vector<16x8xf32>
    %52 = vector.shape_cast %51 : vector<16x8xf32> to vector<2x8x8xf32>
    %53 = tpu.concatenate %46, %48, %50, %52 in 0 : vector<2x8x8xf32>, vector<2x8x8xf32>, vector<2x8x8xf32>, vector<2x8x8xf32> -> vector<8x8x8xf32>
    %54 = vector.extract_strided_slice %35 {offsets = [0, 64], sizes = [16, 8], strides = [1, 1]} : vector<16x96xf32> to vector<16x8xf32>
    %55 = vector.shape_cast %54 : vector<16x8xf32> to vector<2x8x8xf32>
    %56 = vector.extract_strided_slice %35 {offsets = [0, 72], sizes = [16, 8], strides = [1, 1]} : vector<16x96xf32> to vector<16x8xf32>
    %57 = vector.shape_cast %56 : vector<16x8xf32> to vector<2x8x8xf32>
    %58 = vector.extract_strided_slice %35 {offsets = [0, 80], sizes = [16, 8], strides = [1, 1]} : vector<16x96xf32> to vector<16x8xf32>
    %59 = vector.shape_cast %58 : vector<16x8xf32> to vector<2x8x8xf32>
    %60 = vector.extract_strided_slice %35 {offsets = [0, 88], sizes = [16, 8], strides = [1, 1]} : vector<16x96xf32> to vector<16x8xf32>
    %61 = vector.shape_cast %60 : vector<16x8xf32> to vector<2x8x8xf32>
    %62 = tpu.concatenate %55, %57, %59, %61 in 0 : vector<2x8x8xf32>, vector<2x8x8xf32>, vector<2x8x8xf32>, vector<2x8x8xf32> -> vector<8x8x8xf32>
    "tpu.trace_start"() <{level = 10 : i32, message = "nqd,nkd->nqk"}> : () -> ()
    %cst_20 = arith.constant dense<0.000000e+00> : vector<8x8x8xf32>
    %63 = tpu.matmul %44, %53, %cst_20 {dimension_numbers = #tpu.dot_dimension_numbers<[2], [2], [1], [1], [0, 0, 0, 1, 1, 1], [0], [0]>} : vector<8x8x8xf32>, vector<8x8x8xf32>, vector<8x8x8xf32> -> vector<8x8x8xf32>
    "tpu.trace_stop"() : () -> ()
    %64 = vector.broadcast %2 : vector<1x8x8xf32> to vector<8x8x8xf32>
    %65 = arith.addf %63, %64 : vector<8x8x8xf32>
    %cst_21 = arith.constant dense<0xFF800000> : vector<8x8xf32>
    %66 = vector.multi_reduction <maximumf>, %65, %cst_21 [2] : vector<8x8x8xf32> to vector<8x8xf32>
    %67 = vector.shape_cast %66 : vector<8x8xf32> to vector<8x8x1xf32>
    %68 = vector.broadcast %67 : vector<8x8x1xf32> to vector<8x8x8xf32>
    %69 = arith.subf %65, %68 : vector<8x8x8xf32>
    %70 = math.exp %69 : vector<8x8x8xf32>
    %cst_22 = arith.constant dense<0.000000e+00> : vector<8x8xf32>
    %71 = vector.multi_reduction <add>, %70, %cst_22 [2] : vector<8x8x8xf32> to vector<8x8xf32>
    %72 = vector.shape_cast %71 : vector<8x8xf32> to vector<8x8x1xf32>
    %73 = tpu.reciprocal %72 {approx = true} : vector<8x8x1xf32> -> vector<8x8x1xf32>
    %74 = vector.broadcast %73 : vector<8x8x1xf32> to vector<8x8x8xf32>
    %75 = arith.mulf %70, %74 : vector<8x8x8xf32>
    "tpu.trace_start"() <{level = 10 : i32, message = "nqk,nkd->nqd"}> : () -> ()
    %cst_23 = arith.constant dense<0.000000e+00> : vector<8x8x8xf32>
    %76 = tpu.matmul %75, %62, %cst_23 {dimension_numbers = #tpu.dot_dimension_numbers<[2], [1], [1], [2], [0, 0, 0, 1, 1, 2], [0], [0]>} : vector<8x8x8xf32>, vector<8x8x8xf32>, vector<8x8x8xf32> -> vector<8x8x8xf32>
    "tpu.trace_stop"() : () -> ()
    %77 = vector.extract_strided_slice %76 {offsets = [0, 0, 0], sizes = [2, 8, 8], strides = [1, 1, 1]} : vector<8x8x8xf32> to vector<2x8x8xf32>
    %78 = vector.shape_cast %77 : vector<2x8x8xf32> to vector<16x8xf32>
    %79 = vector.extract_strided_slice %76 {offsets = [2, 0, 0], sizes = [2, 8, 8], strides = [1, 1, 1]} : vector<8x8x8xf32> to vector<2x8x8xf32>
    %80 = vector.shape_cast %79 : vector<2x8x8xf32> to vector<16x8xf32>
    %81 = vector.extract_strided_slice %76 {offsets = [4, 0, 0], sizes = [2, 8, 8], strides = [1, 1, 1]} : vector<8x8x8xf32> to vector<2x8x8xf32>
    %82 = vector.shape_cast %81 : vector<2x8x8xf32> to vector<16x8xf32>
    %83 = vector.extract_strided_slice %76 {offsets = [6, 0, 0], sizes = [2, 8, 8], strides = [1, 1, 1]} : vector<8x8x8xf32> to vector<2x8x8xf32>
    %84 = vector.shape_cast %83 : vector<2x8x8xf32> to vector<16x8xf32>
    %85 = tpu.concatenate %78, %80, %82, %84 in 1 : vector<16x8xf32>, vector<16x8xf32>, vector<16x8xf32>, vector<16x8xf32> -> vector<16x32xf32>
    %c0_24 = arith.constant 0 : index
    %c0_25 = arith.constant 0 : index
    %c0_26 = arith.constant 0 : index
    %86 = vector.load %arg7[%c0_24, %c0_25, %c0_26] : memref<2x32x32xf32, #tpu.memory_space<vmem>>, vector<1x32x32xf32>
    %87 = vector.shape_cast %86 : vector<1x32x32xf32> to vector<32x32xf32>
    %cst_27 = arith.constant dense<0.000000e+00> : vector<16x32xf32>
    %88 = tpu.matmul %85, %87, %cst_27 {dimension_numbers = #tpu.dot_dimension_numbers<[1], [0], [0], [1], [0, 0, 1, 1], [], []>} : vector<16x32xf32>, vector<32x32xf32>, vector<16x32xf32> -> vector<16x32xf32>
    %89 = arith.addf %0, %88 : vector<16x32xf32>
    %c0_28 = arith.constant 0 : index
    %c0_29 = arith.constant 0 : index
    %c0_30 = arith.constant 0 : index
    %90 = vector.load %arg8[%c0_28, %c0_29, %c0_30] : memref<2x1x32xf32, #tpu.memory_space<vmem>>, vector<1x1x32xf32>
    %91 = vector.shape_cast %90 : vector<1x1x32xf32> to vector<1x32xf32>
    %92 = vector.broadcast %91 : vector<1x32xf32> to vector<16x32xf32>
    %93 = arith.addf %89, %92 : vector<16x32xf32>
    %c0_31 = arith.constant 0 : index
    %c0_32 = arith.constant 0 : index
    %c0_33 = arith.constant 0 : index
    %94 = vector.load %arg9[%c0_31, %c0_32, %c0_33] : memref<2x1x32xf32, #tpu.memory_space<vmem>>, vector<1x1x32xf32>
    %95 = vector.shape_cast %94 : vector<1x1x32xf32> to vector<1x32xf32>
    %c0_34 = arith.constant 0 : index
    %c0_35 = arith.constant 0 : index
    %c0_36 = arith.constant 0 : index
    %96 = vector.load %arg10[%c0_34, %c0_35, %c0_36] : memref<2x1x32xf32, #tpu.memory_space<vmem>>, vector<1x1x32xf32>
    %97 = vector.shape_cast %96 : vector<1x1x32xf32> to vector<1x32xf32>
    %cst_37 = arith.constant dense<0.000000e+00> : vector<16xf32>
    %98 = vector.multi_reduction <add>, %93, %cst_37 [1] : vector<16x32xf32> to vector<16xf32>
    %99 = vector.shape_cast %98 : vector<16xf32> to vector<16x1xf32>
    %cst_38 = arith.constant 3.200000e+01 : f32
    %100 = vector.broadcast %cst_38 : f32 to vector<16x1xf32>
    %101 = arith.divf %99, %100 : vector<16x1xf32>
    %102 = vector.broadcast %101 : vector<16x1xf32> to vector<16x32xf32>
    %103 = arith.subf %93, %102 : vector<16x32xf32>
    %104 = arith.mulf %103, %103 : vector<16x32xf32>
    %cst_39 = arith.constant dense<0.000000e+00> : vector<16xf32>
    %105 = vector.multi_reduction <add>, %104, %cst_39 [1] : vector<16x32xf32> to vector<16xf32>
    %106 = vector.shape_cast %105 : vector<16xf32> to vector<16x1xf32>
    %cst_40 = arith.constant 3.200000e+01 : f32
    %107 = vector.broadcast %cst_40 : f32 to vector<16x1xf32>
    %108 = arith.divf %106, %107 : vector<16x1xf32>
    %109 = vector.broadcast %101 : vector<16x1xf32> to vector<16x32xf32>
    %110 = arith.subf %93, %109 : vector<16x32xf32>
    %cst_41 = arith.constant 9.99999974E-6 : f32
    %111 = vector.broadcast %cst_41 : f32 to vector<16x1xf32>
    %112 = arith.addf %108, %111 : vector<16x1xf32>
    %113 = math.rsqrt %112 : vector<16x1xf32>
    %114 = vector.broadcast %113 : vector<16x1xf32> to vector<16x32xf32>
    %115 = arith.mulf %110, %114 : vector<16x32xf32>
    %116 = vector.broadcast %95 : vector<1x32xf32> to vector<16x32xf32>
    %117 = arith.mulf %115, %116 : vector<16x32xf32>
    %118 = vector.broadcast %97 : vector<1x32xf32> to vector<16x32xf32>
    %119 = arith.addf %117, %118 : vector<16x32xf32>
    %c0_42 = arith.constant 0 : index
    %c0_43 = arith.constant 0 : index
    %c0_44 = arith.constant 0 : index
    %120 = vector.load %arg11[%c0_42, %c0_43, %c0_44] : memref<2x32x128xf32, #tpu.memory_space<vmem>>, vector<1x32x128xf32>
    %121 = vector.shape_cast %120 : vector<1x32x128xf32> to vector<32x128xf32>
    %cst_45 = arith.constant dense<0.000000e+00> : vector<16x128xf32>
    %122 = tpu.matmul %119, %121, %cst_45 {dimension_numbers = #tpu.dot_dimension_numbers<[1], [0], [0], [1], [0, 0, 1, 1], [], []>} : vector<16x32xf32>, vector<32x128xf32>, vector<16x128xf32> -> vector<16x128xf32>
    %c0_46 = arith.constant 0 : index
    %c0_47 = arith.constant 0 : index
    %c0_48 = arith.constant 0 : index
    %123 = vector.load %arg12[%c0_46, %c0_47, %c0_48] : memref<2x1x128xf32, #tpu.memory_space<vmem>>, vector<1x1x128xf32>
    %124 = vector.shape_cast %123 : vector<1x1x128xf32> to vector<1x128xf32>
    %125 = vector.broadcast %124 : vector<1x128xf32> to vector<16x128xf32>
    %126 = arith.addf %122, %125 : vector<16x128xf32>
    %127 = arith.mulf %126, %126 : vector<16x128xf32>
    %128 = arith.mulf %126, %127 : vector<16x128xf32>
    %cst_49 = arith.constant 4.471500e-02 : f32
    %129 = vector.broadcast %cst_49 : f32 to vector<16x128xf32>
    %130 = arith.mulf %129, %128 : vector<16x128xf32>
    %131 = arith.addf %126, %130 : vector<16x128xf32>
    %cst_50 = arith.constant 0.797884583 : f32
    %132 = vector.broadcast %cst_50 : f32 to vector<16x128xf32>
    %133 = arith.mulf %132, %131 : vector<16x128xf32>
    %134 = math.tanh %133 : vector<16x128xf32>
    %cst_51 = arith.constant 1.000000e+00 : f32
    %135 = vector.broadcast %cst_51 : f32 to vector<16x128xf32>
    %136 = arith.addf %135, %134 : vector<16x128xf32>
    %cst_52 = arith.constant 5.000000e-01 : f32
    %137 = vector.broadcast %cst_52 : f32 to vector<16x128xf32>
    %138 = arith.mulf %137, %136 : vector<16x128xf32>
    %139 = arith.mulf %126, %138 : vector<16x128xf32>
    %c0_53 = arith.constant 0 : index
    %c0_54 = arith.constant 0 : index
    %c0_55 = arith.constant 0 : index
    %140 = vector.load %arg13[%c0_53, %c0_54, %c0_55] : memref<2x128x32xf32, #tpu.memory_space<vmem>>, vector<1x128x32xf32>
    %141 = vector.shape_cast %140 : vector<1x128x32xf32> to vector<128x32xf32>
    %cst_56 = arith.constant dense<0.000000e+00> : vector<16x32xf32>
    %142 = tpu.matmul %139, %141, %cst_56 {dimension_numbers = #tpu.dot_dimension_numbers<[1], [0], [0], [1], [0, 0, 1, 1], [], []>} : vector<16x128xf32>, vector<128x32xf32>, vector<16x32xf32> -> vector<16x32xf32>
    %143 = arith.addf %93, %142 : vector<16x32xf32>
    %c0_57 = arith.constant 0 : index
    %c0_58 = arith.constant 0 : index
    %c0_59 = arith.constant 0 : index
    %144 = vector.load %arg14[%c0_57, %c0_58, %c0_59] : memref<2x1x32xf32, #tpu.memory_space<vmem>>, vector<1x1x32xf32>
    %145 = vector.shape_cast %144 : vector<1x1x32xf32> to vector<1x32xf32>
    %146 = vector.broadcast %145 : vector<1x32xf32> to vector<16x32xf32>
    %147 = arith.addf %143, %146 : vector<16x32xf32>
    %c1 = arith.constant 1 : index
    %c0_60 = arith.constant 0 : index
    %c0_61 = arith.constant 0 : index
    %148 = vector.load %arg3[%c1, %c0_60, %c0_61] : memref<2x1x32xf32, #tpu.memory_space<vmem>>, vector<1x1x32xf32>
    %149 = vector.shape_cast %148 : vector<1x1x32xf32> to vector<1x32xf32>
    %c1_62 = arith.constant 1 : index
    %c0_63 = arith.constant 0 : index
    %c0_64 = arith.constant 0 : index
    %150 = vector.load %arg4[%c1_62, %c0_63, %c0_64] : memref<2x1x32xf32, #tpu.memory_space<vmem>>, vector<1x1x32xf32>
    %151 = vector.shape_cast %150 : vector<1x1x32xf32> to vector<1x32xf32>
    %cst_65 = arith.constant dense<0.000000e+00> : vector<16xf32>
    %152 = vector.multi_reduction <add>, %147, %cst_65 [1] : vector<16x32xf32> to vector<16xf32>
    %153 = vector.shape_cast %152 : vector<16xf32> to vector<16x1xf32>
    %cst_66 = arith.constant 3.200000e+01 : f32
    %154 = vector.broadcast %cst_66 : f32 to vector<16x1xf32>
    %155 = arith.divf %153, %154 : vector<16x1xf32>
    %156 = vector.broadcast %155 : vector<16x1xf32> to vector<16x32xf32>
    %157 = arith.subf %147, %156 : vector<16x32xf32>
    %158 = arith.mulf %157, %157 : vector<16x32xf32>
    %cst_67 = arith.constant dense<0.000000e+00> : vector<16xf32>
    %159 = vector.multi_reduction <add>, %158, %cst_67 [1] : vector<16x32xf32> to vector<16xf32>
    %160 = vector.shape_cast %159 : vector<16xf32> to vector<16x1xf32>
    %cst_68 = arith.constant 3.200000e+01 : f32
    %161 = vector.broadcast %cst_68 : f32 to vector<16x1xf32>
    %162 = arith.divf %160, %161 : vector<16x1xf32>
    %163 = vector.broadcast %155 : vector<16x1xf32> to vector<16x32xf32>
    %164 = arith.subf %147, %163 : vector<16x32xf32>
    %cst_69 = arith.constant 9.99999974E-6 : f32
    %165 = vector.broadcast %cst_69 : f32 to vector<16x1xf32>
    %166 = arith.addf %162, %165 : vector<16x1xf32>
    %167 = math.rsqrt %166 : vector<16x1xf32>
    %168 = vector.broadcast %167 : vector<16x1xf32> to vector<16x32xf32>
    %169 = arith.mulf %164, %168 : vector<16x32xf32>
    %170 = vector.broadcast %149 : vector<1x32xf32> to vector<16x32xf32>
    %171 = arith.mulf %169, %170 : vector<16x32xf32>
    %172 = vector.broadcast %151 : vector<1x32xf32> to vector<16x32xf32>
    %173 = arith.addf %171, %172 : vector<16x32xf32>
    %c1_70 = arith.constant 1 : index
    %c0_71 = arith.constant 0 : index
    %c0_72 = arith.constant 0 : index
    %174 = vector.load %arg5[%c1_70, %c0_71, %c0_72] : memref<2x32x96xf32, #tpu.memory_space<vmem>>, vector<1x32x96xf32>
    %175 = vector.shape_cast %174 : vector<1x32x96xf32> to vector<32x96xf32>
    %cst_73 = arith.constant dense<0.000000e+00> : vector<16x96xf32>
    %176 = tpu.matmul %173, %175, %cst_73 {dimension_numbers = #tpu.dot_dimension_numbers<[1], [0], [0], [1], [0, 0, 1, 1], [], []>} : vector<16x32xf32>, vector<32x96xf32>, vector<16x96xf32> -> vector<16x96xf32>
    %c1_74 = arith.constant 1 : index
    %c0_75 = arith.constant 0 : index
    %c0_76 = arith.constant 0 : index
    %177 = vector.load %arg6[%c1_74, %c0_75, %c0_76] : memref<2x1x96xf32, #tpu.memory_space<vmem>>, vector<1x1x96xf32>
    %178 = vector.shape_cast %177 : vector<1x1x96xf32> to vector<1x96xf32>
    %179 = vector.broadcast %178 : vector<1x96xf32> to vector<16x96xf32>
    %180 = arith.addf %176, %179 : vector<16x96xf32>
    %181 = vector.extract_strided_slice %180 {offsets = [0, 0], sizes = [16, 8], strides = [1, 1]} : vector<16x96xf32> to vector<16x8xf32>
    %182 = vector.shape_cast %181 : vector<16x8xf32> to vector<2x8x8xf32>
    %183 = vector.extract_strided_slice %180 {offsets = [0, 8], sizes = [16, 8], strides = [1, 1]} : vector<16x96xf32> to vector<16x8xf32>
    %184 = vector.shape_cast %183 : vector<16x8xf32> to vector<2x8x8xf32>
    %185 = vector.extract_strided_slice %180 {offsets = [0, 16], sizes = [16, 8], strides = [1, 1]} : vector<16x96xf32> to vector<16x8xf32>
    %186 = vector.shape_cast %185 : vector<16x8xf32> to vector<2x8x8xf32>
    %187 = vector.extract_strided_slice %180 {offsets = [0, 24], sizes = [16, 8], strides = [1, 1]} : vector<16x96xf32> to vector<16x8xf32>
    %188 = vector.shape_cast %187 : vector<16x8xf32> to vector<2x8x8xf32>
    %189 = tpu.concatenate %182, %184, %186, %188 in 0 : vector<2x8x8xf32>, vector<2x8x8xf32>, vector<2x8x8xf32>, vector<2x8x8xf32> -> vector<8x8x8xf32>
    %190 = vector.extract_strided_slice %180 {offsets = [0, 32], sizes = [16, 8], strides = [1, 1]} : vector<16x96xf32> to vector<16x8xf32>
    %191 = vector.shape_cast %190 : vector<16x8xf32> to vector<2x8x8xf32>
    %192 = vector.extract_strided_slice %180 {offsets = [0, 40], sizes = [16, 8], strides = [1, 1]} : vector<16x96xf32> to vector<16x8xf32>
    %193 = vector.shape_cast %192 : vector<16x8xf32> to vector<2x8x8xf32>
    %194 = vector.extract_strided_slice %180 {offsets = [0, 48], sizes = [16, 8], strides = [1, 1]} : vector<16x96xf32> to vector<16x8xf32>
    %195 = vector.shape_cast %194 : vector<16x8xf32> to vector<2x8x8xf32>
    %196 = vector.extract_strided_slice %180 {offsets = [0, 56], sizes = [16, 8], strides = [1, 1]} : vector<16x96xf32> to vector<16x8xf32>
    %197 = vector.shape_cast %196 : vector<16x8xf32> to vector<2x8x8xf32>
    %198 = tpu.concatenate %191, %193, %195, %197 in 0 : vector<2x8x8xf32>, vector<2x8x8xf32>, vector<2x8x8xf32>, vector<2x8x8xf32> -> vector<8x8x8xf32>
    %199 = vector.extract_strided_slice %180 {offsets = [0, 64], sizes = [16, 8], strides = [1, 1]} : vector<16x96xf32> to vector<16x8xf32>
    %200 = vector.shape_cast %199 : vector<16x8xf32> to vector<2x8x8xf32>
    %201 = vector.extract_strided_slice %180 {offsets = [0, 72], sizes = [16, 8], strides = [1, 1]} : vector<16x96xf32> to vector<16x8xf32>
    %202 = vector.shape_cast %201 : vector<16x8xf32> to vector<2x8x8xf32>
    %203 = vector.extract_strided_slice %180 {offsets = [0, 80], sizes = [16, 8], strides = [1, 1]} : vector<16x96xf32> to vector<16x8xf32>
    %204 = vector.shape_cast %203 : vector<16x8xf32> to vector<2x8x8xf32>
    %205 = vector.extract_strided_slice %180 {offsets = [0, 88], sizes = [16, 8], strides = [1, 1]} : vector<16x96xf32> to vector<16x8xf32>
    %206 = vector.shape_cast %205 : vector<16x8xf32> to vector<2x8x8xf32>
    %207 = tpu.concatenate %200, %202, %204, %206 in 0 : vector<2x8x8xf32>, vector<2x8x8xf32>, vector<2x8x8xf32>, vector<2x8x8xf32> -> vector<8x8x8xf32>
    "tpu.trace_start"() <{level = 10 : i32, message = "nqd,nkd->nqk"}> : () -> ()
    %cst_77 = arith.constant dense<0.000000e+00> : vector<8x8x8xf32>
    %208 = tpu.matmul %189, %198, %cst_77 {dimension_numbers = #tpu.dot_dimension_numbers<[2], [2], [1], [1], [0, 0, 0, 1, 1, 1], [0], [0]>} : vector<8x8x8xf32>, vector<8x8x8xf32>, vector<8x8x8xf32> -> vector<8x8x8xf32>
    "tpu.trace_stop"() : () -> ()
    %209 = vector.broadcast %2 : vector<1x8x8xf32> to vector<8x8x8xf32>
    %210 = arith.addf %208, %209 : vector<8x8x8xf32>
    %cst_78 = arith.constant dense<0xFF800000> : vector<8x8xf32>
    %211 = vector.multi_reduction <maximumf>, %210, %cst_78 [2] : vector<8x8x8xf32> to vector<8x8xf32>
    %212 = vector.shape_cast %211 : vector<8x8xf32> to vector<8x8x1xf32>
    %213 = vector.broadcast %212 : vector<8x8x1xf32> to vector<8x8x8xf32>
    %214 = arith.subf %210, %213 : vector<8x8x8xf32>
    %215 = math.exp %214 : vector<8x8x8xf32>
    %cst_79 = arith.constant dense<0.000000e+00> : vector<8x8xf32>
    %216 = vector.multi_reduction <add>, %215, %cst_79 [2] : vector<8x8x8xf32> to vector<8x8xf32>
    %217 = vector.shape_cast %216 : vector<8x8xf32> to vector<8x8x1xf32>
    %218 = tpu.reciprocal %217 {approx = true} : vector<8x8x1xf32> -> vector<8x8x1xf32>
    %219 = vector.broadcast %218 : vector<8x8x1xf32> to vector<8x8x8xf32>
    %220 = arith.mulf %215, %219 : vector<8x8x8xf32>
    "tpu.trace_start"() <{level = 10 : i32, message = "nqk,nkd->nqd"}> : () -> ()
    %cst_80 = arith.constant dense<0.000000e+00> : vector<8x8x8xf32>
    %221 = tpu.matmul %220, %207, %cst_80 {dimension_numbers = #tpu.dot_dimension_numbers<[2], [1], [1], [2], [0, 0, 0, 1, 1, 2], [0], [0]>} : vector<8x8x8xf32>, vector<8x8x8xf32>, vector<8x8x8xf32> -> vector<8x8x8xf32>
    "tpu.trace_stop"() : () -> ()
    %222 = vector.extract_strided_slice %221 {offsets = [0, 0, 0], sizes = [2, 8, 8], strides = [1, 1, 1]} : vector<8x8x8xf32> to vector<2x8x8xf32>
    %223 = vector.shape_cast %222 : vector<2x8x8xf32> to vector<16x8xf32>
    %224 = vector.extract_strided_slice %221 {offsets = [2, 0, 0], sizes = [2, 8, 8], strides = [1, 1, 1]} : vector<8x8x8xf32> to vector<2x8x8xf32>
    %225 = vector.shape_cast %224 : vector<2x8x8xf32> to vector<16x8xf32>
    %226 = vector.extract_strided_slice %221 {offsets = [4, 0, 0], sizes = [2, 8, 8], strides = [1, 1, 1]} : vector<8x8x8xf32> to vector<2x8x8xf32>
    %227 = vector.shape_cast %226 : vector<2x8x8xf32> to vector<16x8xf32>
    %228 = vector.extract_strided_slice %221 {offsets = [6, 0, 0], sizes = [2, 8, 8], strides = [1, 1, 1]} : vector<8x8x8xf32> to vector<2x8x8xf32>
    %229 = vector.shape_cast %228 : vector<2x8x8xf32> to vector<16x8xf32>
    %230 = tpu.concatenate %223, %225, %227, %229 in 1 : vector<16x8xf32>, vector<16x8xf32>, vector<16x8xf32>, vector<16x8xf32> -> vector<16x32xf32>
    %c1_81 = arith.constant 1 : index
    %c0_82 = arith.constant 0 : index
    %c0_83 = arith.constant 0 : index
    %231 = vector.load %arg7[%c1_81, %c0_82, %c0_83] : memref<2x32x32xf32, #tpu.memory_space<vmem>>, vector<1x32x32xf32>
    %232 = vector.shape_cast %231 : vector<1x32x32xf32> to vector<32x32xf32>
    %cst_84 = arith.constant dense<0.000000e+00> : vector<16x32xf32>
    %233 = tpu.matmul %230, %232, %cst_84 {dimension_numbers = #tpu.dot_dimension_numbers<[1], [0], [0], [1], [0, 0, 1, 1], [], []>} : vector<16x32xf32>, vector<32x32xf32>, vector<16x32xf32> -> vector<16x32xf32>
    %234 = arith.addf %147, %233 : vector<16x32xf32>
    %c1_85 = arith.constant 1 : index
    %c0_86 = arith.constant 0 : index
    %c0_87 = arith.constant 0 : index
    %235 = vector.load %arg8[%c1_85, %c0_86, %c0_87] : memref<2x1x32xf32, #tpu.memory_space<vmem>>, vector<1x1x32xf32>
    %236 = vector.shape_cast %235 : vector<1x1x32xf32> to vector<1x32xf32>
    %237 = vector.broadcast %236 : vector<1x32xf32> to vector<16x32xf32>
    %238 = arith.addf %234, %237 : vector<16x32xf32>
    %c1_88 = arith.constant 1 : index
    %c0_89 = arith.constant 0 : index
    %c0_90 = arith.constant 0 : index
    %239 = vector.load %arg9[%c1_88, %c0_89, %c0_90] : memref<2x1x32xf32, #tpu.memory_space<vmem>>, vector<1x1x32xf32>
    %240 = vector.shape_cast %239 : vector<1x1x32xf32> to vector<1x32xf32>
    %c1_91 = arith.constant 1 : index
    %c0_92 = arith.constant 0 : index
    %c0_93 = arith.constant 0 : index
    %241 = vector.load %arg10[%c1_91, %c0_92, %c0_93] : memref<2x1x32xf32, #tpu.memory_space<vmem>>, vector<1x1x32xf32>
    %242 = vector.shape_cast %241 : vector<1x1x32xf32> to vector<1x32xf32>
    %cst_94 = arith.constant dense<0.000000e+00> : vector<16xf32>
    %243 = vector.multi_reduction <add>, %238, %cst_94 [1] : vector<16x32xf32> to vector<16xf32>
    %244 = vector.shape_cast %243 : vector<16xf32> to vector<16x1xf32>
    %cst_95 = arith.constant 3.200000e+01 : f32
    %245 = vector.broadcast %cst_95 : f32 to vector<16x1xf32>
    %246 = arith.divf %244, %245 : vector<16x1xf32>
    %247 = vector.broadcast %246 : vector<16x1xf32> to vector<16x32xf32>
    %248 = arith.subf %238, %247 : vector<16x32xf32>
    %249 = arith.mulf %248, %248 : vector<16x32xf32>
    %cst_96 = arith.constant dense<0.000000e+00> : vector<16xf32>
    %250 = vector.multi_reduction <add>, %249, %cst_96 [1] : vector<16x32xf32> to vector<16xf32>
    %251 = vector.shape_cast %250 : vector<16xf32> to vector<16x1xf32>
    %cst_97 = arith.constant 3.200000e+01 : f32
    %252 = vector.broadcast %cst_97 : f32 to vector<16x1xf32>
    %253 = arith.divf %251, %252 : vector<16x1xf32>
    %254 = vector.broadcast %246 : vector<16x1xf32> to vector<16x32xf32>
    %255 = arith.subf %238, %254 : vector<16x32xf32>
    %cst_98 = arith.constant 9.99999974E-6 : f32
    %256 = vector.broadcast %cst_98 : f32 to vector<16x1xf32>
    %257 = arith.addf %253, %256 : vector<16x1xf32>
    %258 = math.rsqrt %257 : vector<16x1xf32>
    %259 = vector.broadcast %258 : vector<16x1xf32> to vector<16x32xf32>
    %260 = arith.mulf %255, %259 : vector<16x32xf32>
    %261 = vector.broadcast %240 : vector<1x32xf32> to vector<16x32xf32>
    %262 = arith.mulf %260, %261 : vector<16x32xf32>
    %263 = vector.broadcast %242 : vector<1x32xf32> to vector<16x32xf32>
    %264 = arith.addf %262, %263 : vector<16x32xf32>
    %c1_99 = arith.constant 1 : index
    %c0_100 = arith.constant 0 : index
    %c0_101 = arith.constant 0 : index
    %265 = vector.load %arg11[%c1_99, %c0_100, %c0_101] : memref<2x32x128xf32, #tpu.memory_space<vmem>>, vector<1x32x128xf32>
    %266 = vector.shape_cast %265 : vector<1x32x128xf32> to vector<32x128xf32>
    %cst_102 = arith.constant dense<0.000000e+00> : vector<16x128xf32>
    %267 = tpu.matmul %264, %266, %cst_102 {dimension_numbers = #tpu.dot_dimension_numbers<[1], [0], [0], [1], [0, 0, 1, 1], [], []>} : vector<16x32xf32>, vector<32x128xf32>, vector<16x128xf32> -> vector<16x128xf32>
    %c1_103 = arith.constant 1 : index
    %c0_104 = arith.constant 0 : index
    %c0_105 = arith.constant 0 : index
    %268 = vector.load %arg12[%c1_103, %c0_104, %c0_105] : memref<2x1x128xf32, #tpu.memory_space<vmem>>, vector<1x1x128xf32>
    %269 = vector.shape_cast %268 : vector<1x1x128xf32> to vector<1x128xf32>
    %270 = vector.broadcast %269 : vector<1x128xf32> to vector<16x128xf32>
    %271 = arith.addf %267, %270 : vector<16x128xf32>
    %272 = arith.mulf %271, %271 : vector<16x128xf32>
    %273 = arith.mulf %271, %272 : vector<16x128xf32>
    %cst_106 = arith.constant 4.471500e-02 : f32
    %274 = vector.broadcast %cst_106 : f32 to vector<16x128xf32>
    %275 = arith.mulf %274, %273 : vector<16x128xf32>
    %276 = arith.addf %271, %275 : vector<16x128xf32>
    %cst_107 = arith.constant 0.797884583 : f32
    %277 = vector.broadcast %cst_107 : f32 to vector<16x128xf32>
    %278 = arith.mulf %277, %276 : vector<16x128xf32>
    %279 = math.tanh %278 : vector<16x128xf32>
    %cst_108 = arith.constant 1.000000e+00 : f32
    %280 = vector.broadcast %cst_108 : f32 to vector<16x128xf32>
    %281 = arith.addf %280, %279 : vector<16x128xf32>
    %cst_109 = arith.constant 5.000000e-01 : f32
    %282 = vector.broadcast %cst_109 : f32 to vector<16x128xf32>
    %283 = arith.mulf %282, %281 : vector<16x128xf32>
    %284 = arith.mulf %271, %283 : vector<16x128xf32>
    %c1_110 = arith.constant 1 : index
    %c0_111 = arith.constant 0 : index
    %c0_112 = arith.constant 0 : index
    %285 = vector.load %arg13[%c1_110, %c0_111, %c0_112] : memref<2x128x32xf32, #tpu.memory_space<vmem>>, vector<1x128x32xf32>
    %286 = vector.shape_cast %285 : vector<1x128x32xf32> to vector<128x32xf32>
    %cst_113 = arith.constant dense<0.000000e+00> : vector<16x32xf32>
    %287 = tpu.matmul %284, %286, %cst_113 {dimension_numbers = #tpu.dot_dimension_numbers<[1], [0], [0], [1], [0, 0, 1, 1], [], []>} : vector<16x128xf32>, vector<128x32xf32>, vector<16x32xf32> -> vector<16x32xf32>
    %288 = arith.addf %238, %287 : vector<16x32xf32>
    %c1_114 = arith.constant 1 : index
    %c0_115 = arith.constant 0 : index
    %c0_116 = arith.constant 0 : index
    %289 = vector.load %arg14[%c1_114, %c0_115, %c0_116] : memref<2x1x32xf32, #tpu.memory_space<vmem>>, vector<1x1x32xf32>
    %290 = vector.shape_cast %289 : vector<1x1x32xf32> to vector<1x32xf32>
    %291 = vector.broadcast %290 : vector<1x32xf32> to vector<16x32xf32>
    %292 = arith.addf %288, %291 : vector<16x32xf32>
    %c0_117 = arith.constant 0 : index
    %c0_118 = arith.constant 0 : index
    %293 = vector.load %arg2[%c0_117, %c0_118] : memref<2x16xf32, #tpu.memory_space<vmem>>, vector<2x16xf32>
    %cst_119 = arith.constant dense<0.000000e+00> : vector<2x32xf32>
    %294 = tpu.matmul %293, %292, %cst_119 {dimension_numbers = #tpu.dot_dimension_numbers<[1], [0], [0], [1], [0, 0, 1, 1], [], []>} : vector<2x16xf32>, vector<16x32xf32>, vector<2x32xf32> -> vector<2x32xf32>
    %c0_120 = arith.constant 0 : index
    %c0_121 = arith.constant 0 : index
    %295 = vector.load %arg15[%c0_120, %c0_121] : memref<1x32xf32, #tpu.memory_space<vmem>>, vector<1x32xf32>
    %c0_122 = arith.constant 0 : index
    %c0_123 = arith.constant 0 : index
    %296 = vector.load %arg16[%c0_122, %c0_123] : memref<1x32xf32, #tpu.memory_space<vmem>>, vector<1x32xf32>
    %cst_124 = arith.constant dense<0.000000e+00> : vector<2xf32>
    %297 = vector.multi_reduction <add>, %294, %cst_124 [1] : vector<2x32xf32> to vector<2xf32>
    %298 = vector.shape_cast %297 : vector<2xf32> to vector<2x1xf32>
    %cst_125 = arith.constant 3.200000e+01 : f32
    %299 = vector.broadcast %cst_125 : f32 to vector<2x1xf32>
    %300 = arith.divf %298, %299 : vector<2x1xf32>
    %301 = vector.broadcast %300 : vector<2x1xf32> to vector<2x32xf32>
    %302 = arith.subf %294, %301 : vector<2x32xf32>
    %303 = arith.mulf %302, %302 : vector<2x32xf32>
    %cst_126 = arith.constant dense<0.000000e+00> : vector<2xf32>
    %304 = vector.multi_reduction <add>, %303, %cst_126 [1] : vector<2x32xf32> to vector<2xf32>
    %305 = vector.shape_cast %304 : vector<2xf32> to vector<2x1xf32>
    %cst_127 = arith.constant 3.200000e+01 : f32
    %306 = vector.broadcast %cst_127 : f32 to vector<2x1xf32>
    %307 = arith.divf %305, %306 : vector<2x1xf32>
    %308 = vector.broadcast %300 : vector<2x1xf32> to vector<2x32xf32>
    %309 = arith.subf %294, %308 : vector<2x32xf32>
    %cst_128 = arith.constant 9.99999974E-6 : f32
    %310 = vector.broadcast %cst_128 : f32 to vector<2x1xf32>
    %311 = arith.addf %307, %310 : vector<2x1xf32>
    %312 = math.rsqrt %311 : vector<2x1xf32>
    %313 = vector.broadcast %312 : vector<2x1xf32> to vector<2x32xf32>
    %314 = arith.mulf %309, %313 : vector<2x32xf32>
    %315 = vector.broadcast %295 : vector<1x32xf32> to vector<2x32xf32>
    %316 = arith.mulf %314, %315 : vector<2x32xf32>
    %317 = vector.broadcast %296 : vector<1x32xf32> to vector<2x32xf32>
    %318 = arith.addf %316, %317 : vector<2x32xf32>
    %c0_129 = arith.constant 0 : index
    %c0_130 = arith.constant 0 : index
    %319 = vector.load %arg17[%c0_129, %c0_130] : memref<32x2xf32, #tpu.memory_space<vmem>>, vector<32x2xf32>
    %cst_131 = arith.constant dense<0.000000e+00> : vector<2x2xf32>
    %320 = tpu.matmul %318, %319, %cst_131 {dimension_numbers = #tpu.dot_dimension_numbers<[1], [0], [0], [1], [0, 0, 1, 1], [], []>} : vector<2x32xf32>, vector<32x2xf32>, vector<2x2xf32> -> vector<2x2xf32>
    %c0_132 = arith.constant 0 : index
    %c0_133 = arith.constant 0 : index
    %321 = vector.load %arg18[%c0_132, %c0_133] : memref<1x2xf32, #tpu.memory_space<vmem>>, vector<1x2xf32>
    %322 = vector.broadcast %321 : vector<1x2xf32> to vector<2x2xf32>
    %323 = arith.addf %320, %322 : vector<2x2xf32>
    %c0_134 = arith.constant 0 : index
    %c0_135 = arith.constant 0 : index
    %324 = vector.load %arg19[%c0_134, %c0_135] : memref<2x2xf32, #tpu.memory_space<vmem>>, vector<2x2xf32>
    tpu.vector_store %arg19[%c0_134, %c0_135], %323 {strides = array<i32>} : memref<2x2xf32, #tpu.memory_space<vmem>>, vector<2x2xf32>,
    return
  }
}

</mosaic_0001>

<llo_original>
// kernel: tpu_custom_call.1
$region0: #{tpu_custom_call.1}
  #allocation0 [shape = 'u32[]', space=smem, size = 0x4, offset = 0x4, fixed_abs, tag = 'smem constant byte address 0x4 - core index']
  #allocation1 [shape = 'u32[72,128]{1,0:T(1,128)}', space=vmem, size = 0x9000, scoped, tag = 'internal scratch']
  %s0 = inlined_call_operand.vmem [shape: f32[16,32], index: 0, kind: input, shape index: {}]
  %s1 = inlined_call_operand.vmem [shape: f32[8,8], index: 1, kind: input, shape index: {}]
  %s2 = inlined_call_operand.vmem [shape: f32[2,16], index: 2, kind: input, shape index: {}]
  %s3 = inlined_call_operand.vmem [shape: f32[2,1,32], index: 3, kind: input, shape index: {}]
  %s4 = inlined_call_operand.vmem [shape: f32[2,1,32], index: 4, kind: input, shape index: {}]
  %s5 = inlined_call_operand.vmem [shape: f32[2,32,96], index: 5, kind: input, shape index: {}]
  %s6 = inlined_call_operand.vmem [shape: f32[2,1,96], index: 6, kind: input, shape index: {}]
  %s7 = inlined_call_operand.vmem [shape: f32[2,32,32], index: 7, kind: input, shape index: {}]
  %s8 = inlined_call_operand.vmem [shape: f32[2,1,32], index: 8, kind: input, shape index: {}]
  %s9 = inlined_call_operand.vmem [shape: f32[2,1,32], index: 9, kind: input, shape index: {}]
  %s10 = inlined_call_operand.vmem [shape: f32[2,1,32], index: 10, kind: input, shape index: {}]
  %s11 = inlined_call_operand.vmem [shape: f32[2,32,128], index: 11, kind: input, shape index: {}]
  %s12 = inlined_call_operand.vmem [shape: f32[2,1,128], index: 12, kind: input, shape index: {}]
  %s13 = inlined_call_operand.vmem [shape: f32[2,128,32], index: 13, kind: input, shape index: {}]
  %s14 = inlined_call_operand.vmem [shape: f32[2,1,32], index: 14, kind: input, shape index: {}]
  %s15 = inlined_call_operand.vmem [shape: f32[1,32], index: 15, kind: input, shape index: {}]
  %s16 = inlined_call_operand.vmem [shape: f32[1,32], index: 16, kind: input, shape index: {}]
  %s17 = inlined_call_operand.vmem [shape: f32[32,2], index: 17, kind: input, shape index: {}]
  %s18 = inlined_call_operand.vmem [shape: f32[1,2], index: 18, kind: input, shape index: {}]
  %s19 = inlined_call_operand.hbm [shape: f32[2,2], index: 19, kind: output, shape index: {}]
  %s20 = sld [smem:[#allocation0]]
  $region86: #{tpu_custom_call.1} parent=0
    _
  %s22 = ssub.s32 1, %s20
  %s23 = scalar_select 0, %s22, %s20
  $region1: #{tpu_custom_call.1} parent=0
    #allocation2 [shape = 'u8[1024]{0}', space=vmem, size = 0x400, scoped, tag = 'output window, operand 0, single buffered']
    #allocation3 [shape = 's32[1]{0}', space=sflag, size = 0x4, scoped, tag = 'scoped memory for tpu_custom_call.1']
    %24 = vsyncpa [#allocation3], 0
    // Predicated region
    $region2: #{tpu_custom_call.1} parent=1 // pred_check
      _
    $region3: #{tpu_custom_call.1} parent=1 // pred_check_branch
      %26 = sbr.rel (0) target = $region5
    $region4: #{tpu_custom_call.1} parent=1 // pred_region
      _
    $region5: #{tpu_custom_call.1} parent=1 // pred_fallthru
      _
    // Predicated region
    $region6: #{tpu_custom_call.1} parent=1 // pred_check
      _
    $region7: #{tpu_custom_call.1} parent=1 // pred_check_branch
      %28 = sbr.rel (0) target = $region9
    $region8: #{tpu_custom_call.1} parent=1 // pred_region
      _
    $region9: #{tpu_custom_call.1} parent=1 // pred_fallthru
      _
    // Predicated region
    $region10: #{tpu_custom_call.1} parent=1 // pred_check
      _
    $region11: #{tpu_custom_call.1} parent=1 // pred_check_branch
      %30 = sbr.rel (0) target = $region13
    $region12: #{tpu_custom_call.1} parent=1 // pred_region
      _
    $region13: #{tpu_custom_call.1} parent=1 // pred_fallthru
      _
    // Predicated region
    $region14: #{tpu_custom_call.1} parent=1 // pred_check
      _
    $region15: #{tpu_custom_call.1} parent=1 // pred_check_branch
      %32 = sbr.rel (0) target = $region17
    $region16: #{tpu_custom_call.1} parent=1 // pred_region
      _
    $region17: #{tpu_custom_call.1} parent=1 // pred_fallthru
      _
    // Predicated region
    $region18: #{tpu_custom_call.1} parent=1 // pred_check
      _
    $region19: #{tpu_custom_call.1} parent=1 // pred_check_branch
      %34 = sbr.rel (0) target = $region21
    $region20: #{tpu_custom_call.1} parent=1 // pred_region
      _
    $region21: #{tpu_custom_call.1} parent=1 // pred_fallthru
      _
    // Predicated region
    $region22: #{tpu_custom_call.1} parent=1 // pred_check
      _
    $region23: #{tpu_custom_call.1} parent=1 // pred_check_branch
      %36 = sbr.rel (0) target = $region25
    $region24: #{tpu_custom_call.1} parent=1 // pred_region
      _
    $region25: #{tpu_custom_call.1} parent=1 // pred_fallthru
      _
    // Predicated region
    $region26: #{tpu_custom_call.1} parent=1 // pred_check
      _
    $region27: #{tpu_custom_call.1} parent=1 // pred_check_branch
      %38 = sbr.rel (0) target = $region29
    $region28: #{tpu_custom_call.1} parent=1 // pred_region
      _
    $region29: #{tpu_custom_call.1} parent=1 // pred_fallthru
      _
    // Predicated region
    $region30: #{tpu_custom_call.1} parent=1 // pred_check
      _
    $region31: #{tpu_custom_call.1} parent=1 // pred_check_branch
      %40 = sbr.rel (0) target = $region33
    $region32: #{tpu_custom_call.1} parent=1 // pred_region
      _
    $region33: #{tpu_custom_call.1} parent=1 // pred_fallthru
      _
    // Predicated region
    $region34: #{tpu_custom_call.1} parent=1 // pred_check
      _
    $region35: #{tpu_custom_call.1} parent=1 // pred_check_branch
      %42 = sbr.rel (0) target = $region37
    $region36: #{tpu_custom_call.1} parent=1 // pred_region
      _
    $region37: #{tpu_custom_call.1} parent=1 // pred_fallthru
      _
    // Predicated region
    $region38: #{tpu_custom_call.1} parent=1 // pred_check
      _
    $region39: #{tpu_custom_call.1} parent=1 // pred_check_branch
      %44 = sbr.rel (0) target = $region41
    $region40: #{tpu_custom_call.1} parent=1 // pred_region
      _
    $region41: #{tpu_custom_call.1} parent=1 // pred_fallthru
      _
    // Predicated region
    $region42: #{tpu_custom_call.1} parent=1 // pred_check
      _
    $region43: #{tpu_custom_call.1} parent=1 // pred_check_branch
      %46 = sbr.rel (0) target = $region45
    $region44: #{tpu_custom_call.1} parent=1 // pred_region
      _
    $region45: #{tpu_custom_call.1} parent=1 // pred_fallthru
      _
    // Predicated region
    $region46: #{tpu_custom_call.1} parent=1 // pred_check
      _
    $region47: #{tpu_custom_call.1} parent=1 // pred_check_branch
      %48 = sbr.rel (0) target = $region49
    $region48: #{tpu_custom_call.1} parent=1 // pred_region
      _
    $region49: #{tpu_custom_call.1} parent=1 // pred_fallthru
      _
    // Predicated region
    $region50: #{tpu_custom_call.1} parent=1 // pred_check
      _
    $region51: #{tpu_custom_call.1} parent=1 // pred_check_branch
      %50 = sbr.rel (0) target = $region53
    $region52: #{tpu_custom_call.1} parent=1 // pred_region
      _
    $region53: #{tpu_custom_call.1} parent=1 // pred_fallthru
      _
    // Predicated region
    $region54: #{tpu_custom_call.1} parent=1 // pred_check
      _
    $region55: #{tpu_custom_call.1} parent=1 // pred_check_branch
      %52 = sbr.rel (0) target = $region57
    $region56: #{tpu_custom_call.1} parent=1 // pred_region
      _
    $region57: #{tpu_custom_call.1} parent=1 // pred_fallthru
      _
    // Predicated region
    $region58: #{tpu_custom_call.1} parent=1 // pred_check
      _
    $region59: #{tpu_custom_call.1} parent=1 // pred_check_branch
      %54 = sbr.rel (0) target = $region61
    $region60: #{tpu_custom_call.1} parent=1 // pred_region
      _
    $region61: #{tpu_custom_call.1} parent=1 // pred_fallthru
      _
    // Predicated region
    $region62: #{tpu_custom_call.1} parent=1 // pred_check
      _
    $region63: #{tpu_custom_call.1} parent=1 // pred_check_branch
      %56 = sbr.rel (0) target = $region65
    $region64: #{tpu_custom_call.1} parent=1 // pred_region
      _
    $region65: #{tpu_custom_call.1} parent=1 // pred_fallthru
      _
    // Predicated region
    $region66: #{tpu_custom_call.1} parent=1 // pred_check
      _
    $region67: #{tpu_custom_call.1} parent=1 // pred_check_branch
      %58 = sbr.rel (0) target = $region69
    $region68: #{tpu_custom_call.1} parent=1 // pred_region
      _
    $region69: #{tpu_custom_call.1} parent=1 // pred_fallthru
      _
    // Predicated region
    $region70: #{tpu_custom_call.1} parent=1 // pred_check
      _
    $region71: #{tpu_custom_call.1} parent=1 // pred_check_branch
      %60 = sbr.rel (0) target = $region73
    $region72: #{tpu_custom_call.1} parent=1 // pred_region
      _
    $region73: #{tpu_custom_call.1} parent=1 // pred_fallthru
      _
    // Predicated region
    $region74: #{tpu_custom_call.1} parent=1 // pred_check
      _
    $region75: #{tpu_custom_call.1} parent=1 // pred_check_branch
      %62 = sbr.rel (0) target = $region77
    $region76: #{tpu_custom_call.1} parent=1 // pred_region
      _
    $region77: #{tpu_custom_call.1} parent=1 // pred_fallthru
      _
    %v63 = vld [vmem:[%s0] sm:$0xff]
    %v64 = vld [vmem:[%s0 + $0x8] sm:$0xff]
    %v65 = vld [vmem:[%s1] sm:$0xff]
    %v66 = vld [vmem:[%s3] sm:$0x1]
    %v67 = vld [vmem:[%s4] sm:$0x1]
    %vm68 = vcmask 261120
    %v69 = vsel %vm68, %v63, 0.0
    %70 = vadd.xlane.f32.xlu0 %v69
    %v71 = vpop.xlane.xlu0 %70
    %v72 = vsel %vm68, %v64, 0.0
    %73 = vadd.xlane.f32.xlu0 %v72
    %v74 = vpop.xlane.xlu0 %73
    %v75 = vrcp.pop 32.0
    %v76 = vmul.f32 32.0, %v75
    %v77 = vsub.f32 1.0, %v76
    %v78 = vmul.f32 %v75, %v77
    %v79 = vadd.f32 %v75, %v78
    %vm80 = vweird.f32 %v75
    %v81 = vsel %vm80, %v75, %v79
    %v82 = vmul.f32 %v71, %v81
    %v83 = vmul.f32 %v74, %v81
    %v84 = vsub.f32 %v63, %v82
    %v85 = vsub.f32 %v64, %v83
    %v86 = vmul.f32 %v84, %v84
    %v87 = vmul.f32 %v85, %v85
    %v88 = vsel %vm68, %v86, 0.0
    %89 = vadd.xlane.f32.xlu0 %v88
    %v90 = vpop.xlane.xlu0 %89
    %v91 = vsel %vm68, %v87, 0.0
    %92 = vadd.xlane.f32.xlu0 %v91
    %v93 = vpop.xlane.xlu0 %92
    %v94 = vmul.f32 %v90, %v81
    %v95 = vmul.f32 %v93, %v81
    %v96 = vadd.f32 %v94, 1e-05
    %v97 = vadd.f32 %v95, 1e-05
    %v98 = vrsqrt.pop %v96
    %v99 = vmul.f32 %v98, %v96
    %v100 = vmul.f32 %v99, %v98
    %v101 = vmul.f32 0.5, %v100
    %v102 = vsub.f32 1.5, %v101
    %v103 = vmul.f32 %v98, %v102
    %vm104 = vweird.f32 %v96
    %vm105 = vweird.f32 %v98
    %vm106 = vmor %vm104, %vm105
    %v107 = vsel %vm106, %v98, %v103
    %v108 = vrsqrt.pop %v97
    %v109 = vmul.f32 %v108, %v97
    %v110 = vmul.f32 %v109, %v108
    %v111 = vmul.f32 0.5, %v110
    %v112 = vsub.f32 1.5, %v111
    %v113 = vmul.f32 %v108, %v112
    %vm114 = vweird.f32 %v97
    %vm115 = vweird.f32 %v108
    %vm116 = vmor %vm114, %vm115
    %v117 = vsel %vm116, %v108, %v113
    %v118 = vmul.f32 %v84, %v107
    %v119 = vmul.f32 %v85, %v117
    %v121 = vperm.slane %v66, 0
    %v123 = vmul.f32 %v118, %v121
    %v124 = vmul.f32 %v119, %v121
    %v126 = vperm.slane %v67, 0
    %v128 = vadd.f32 %v123, %v126
    %v129 = vadd.f32 %v124, %v126
    %v130 = vld [vmem:[%s5] sm:$0xff]
    %v131 = vld [vmem:[%s5 + $0x8] sm:$0xff]
    %v132 = vld [vmem:[%s5 + $0x10] sm:$0xff]
    %v133 = vld [vmem:[%s5 + $0x18] sm:$0xff]
    %v134 = vld [vmem:[%s6] sm:$0x1]
    %v136 = vperm.slane %v134, 0
    %v139 = vsel %vm68, %v128, 0
    %v142 = vsel %vm68, %v129, 0
    %144 = vmatpush.msra.mxu0 0.0
    %145 = vmatpush.msra.mxu0 0.0
    %146 = vmatpush.msra.mxu0 0.0
    %147 = vmatpush.msra.mxu0 0.0
    %148 = vmatpush.msra.mxu0 0.0
    %149 = vmatpush.msra.mxu0 0.0
    %150 = vmatpush.msra.mxu0 0.0
    %151 = vmatpush.msra.mxu0 0.0
    %152 = vmatpush.msra.mxu0 0.0
    %153 = vmatpush.msra.mxu0 0.0
    %154 = vmatpush.msra.mxu0 0.0
    %155 = vmatpush.msra.mxu0 0.0
    %156 = vmatpush.msra.mxu0 %v133
    %157 = vmatpush.msra.mxu0 %v132
    %158 = vmatpush.msra.mxu0 %v131
    %159 = vmatpush.msra.mxu0 %v130
    %160 = vmatmul.f32.gmra.mxu0 %v139
    %v161 = vpop.f32.mrf.mxu0
    %v162 = vadd.f32 %v136, %v161
    %163 = vmatmul.f32.gmra.mxu0 %v142
    %v164 = vpop.f32.mrf.mxu0
    %v165 = vadd.f32 %v136, %v164
    %166 = vdwg.mxu0
    %169 = vrot.lane.b32.xlu0 %v162, 120
    %v170 = vpop.permute.xlu0 %169
    %171 = vrot.lane.b32.xlu0 %v165, 120
    %v172 = vpop.permute.xlu0 %171
    %173 = vrot.lane.b32.xlu0 %v162, 112
    %v174 = vpop.permute.xlu0 %173
    %175 = vrot.lane.b32.xlu0 %v165, 112
    %v176 = vpop.permute.xlu0 %175
    %177 = vrot.lane.b32.xlu0 %v162, 104
    %v178 = vpop.permute.xlu0 %177
    %179 = vrot.lane.b32.xlu0 %v165, 104
    %v180 = vpop.permute.xlu0 %179
    %181 = vrot.lane.b32.xlu0 %v162, 96
    %v182 = vpop.permute.xlu0 %181
    %vm183 = vcmask 64512
    %v184 = vsel %vm183, %v162, 0
    %v186 = vsel %vm183, %v182, 0
    %188 = vmatpush.xpose.msra.mxu0 0.0
    %189 = vmatpush.xpose.msra.mxu0 0.0
    %190 = vmatpush.xpose.msra.mxu0 0.0
    %191 = vmatpush.xpose.msra.mxu0 0.0
    %192 = vmatpush.xpose.msra.mxu0 0.0
    %193 = vmatpush.xpose.msra.mxu0 0.0
    %194 = vmatpush.xpose.msra.mxu0 0.0
    %195 = vmatpush.xpose.msra.mxu0 0.0
    %196 = vmatpush.xpose.msra.mxu0 0.0
    %197 = vmatpush.xpose.msra.mxu0 0.0
    %198 = vmatpush.xpose.msra.mxu0 0.0
    %199 = vmatpush.xpose.msra.mxu0 0.0
    %200 = vmatpush.xpose.msra.mxu0 0.0
    %201 = vmatpush.xpose.msra.mxu0 0.0
    %202 = vmatpush.xpose.msra.mxu0 0.0
    %203 = vmatpush.xpose.msra.mxu0 %v186
    %204 = vmatmul.f32.gmra.mxu0 %v184
    %v205 = vpop.f32.mrf.mxu0
    %v206 = vadd.f32 %v65, %v205
    %207 = vdwg.mxu0
    %208 = vrot.lane.b32.xlu0 %v165, 96
    %v209 = vpop.permute.xlu0 %208
    %v210 = vsel %vm183, %v165, 0
    %v212 = vsel %vm183, %v209, 0
    %214 = vmatpush.xpose.msra.mxu0 0.0
    %215 = vmatpush.xpose.msra.mxu0 0.0
    %216 = vmatpush.xpose.msra.mxu0 0.0
    %217 = vmatpush.xpose.msra.mxu0 0.0
    %218 = vmatpush.xpose.msra.mxu0 0.0
    %219 = vmatpush.xpose.msra.mxu0 0.0
    %220 = vmatpush.xpose.msra.mxu0 0.0
    %221 = vmatpush.xpose.msra.mxu0 0.0
    %222 = vmatpush.xpose.msra.mxu0 0.0
    %223 = vmatpush.xpose.msra.mxu0 0.0
    %224 = vmatpush.xpose.msra.mxu0 0.0
    %225 = vmatpush.xpose.msra.mxu0 0.0
    %226 = vmatpush.xpose.msra.mxu0 0.0
    %227 = vmatpush.xpose.msra.mxu0 0.0
    %228 = vmatpush.xpose.msra.mxu0 0.0
    %229 = vmatpush.xpose.msra.mxu0 %v212
    %230 = vmatmul.f32.gmra.mxu0 %v210
    %v231 = vpop.f32.mrf.mxu0
    %v232 = vadd.f32 %v65, %v231
    %233 = vdwg.mxu0
    %234 = vrot.lane.b32.xlu0 %v170, 96
    %v235 = vpop.permute.xlu0 %234
    %v236 = vsel %vm183, %v170, 0
    %v238 = vsel %vm183, %v235, 0
    %240 = vmatpush.xpose.msra.mxu0 0.0
    %241 = vmatpush.xpose.msra.mxu0 0.0
    %242 = vmatpush.xpose.msra.mxu0 0.0
    %243 = vmatpush.xpose.msra.mxu0 0.0
    %244 = vmatpush.xpose.msra.mxu0 0.0
    %245 = vmatpush.xpose.msra.mxu0 0.0
    %246 = vmatpush.xpose.msra.mxu0 0.0
    %247 = vmatpush.xpose.msra.mxu0 0.0
    %248 = vmatpush.xpose.msra.mxu0 0.0
    %249 = vmatpush.xpose.msra.mxu0 0.0
    %250 = vmatpush.xpose.msra.mxu0 0.0
    %251 = vmatpush.xpose.msra.mxu0 0.0
    %252 = vmatpush.xpose.msra.mxu0 0.0
    %253 = vmatpush.xpose.msra.mxu0 0.0
    %254 = vmatpush.xpose.msra.mxu0 0.0
    %255 = vmatpush.xpose.msra.mxu0 %v238
    %256 = vmatmul.f32.gmra.mxu0 %v236
    %v257 = vpop.f32.mrf.mxu0
    %v258 = vadd.f32 %v65, %v257
    %259 = vdwg.mxu0
    %260 = vrot.lane.b32.xlu0 %v172, 96
    %v261 = vpop.permute.xlu0 %260
    %v262 = vsel %vm183, %v172, 0
    %v264 = vsel %vm183, %v261, 0
    %266 = vmatpush.xpose.msra.mxu0 0.0
    %267 = vmatpush.xpose.msra.mxu0 0.0
    %268 = vmatpush.xpose.msra.mxu0 0.0
    %269 = vmatpush.xpose.msra.mxu0 0.0
    %270 = vmatpush.xpose.msra.mxu0 0.0
    %271 = vmatpush.xpose.msra.mxu0 0.0
    %272 = vmatpush.xpose.msra.mxu0 0.0
    %273 = vmatpush.xpose.msra.mxu0 0.0
    %274 = vmatpush.xpose.msra.mxu0 0.0
    %275 = vmatpush.xpose.msra.mxu0 0.0
    %276 = vmatpush.xpose.msra.mxu0 0.0
    %277 = vmatpush.xpose.msra.mxu0 0.0
    %278 = vmatpush.xpose.msra.mxu0 0.0
    %279 = vmatpush.xpose.msra.mxu0 0.0
    %280 = vmatpush.xpose.msra.mxu0 0.0
    %281 = vmatpush.xpose.msra.mxu0 %v264
    %282 = vmatmul.f32.gmra.mxu0 %v262
    %v283 = vpop.f32.mrf.mxu0
    %v284 = vadd.f32 %v65, %v283
    %285 = vdwg.mxu0
    %286 = vrot.lane.b32.xlu0 %v174, 96
    %v287 = vpop.permute.xlu0 %286
    %v288 = vsel %vm183, %v174, 0
    %v290 = vsel %vm183, %v287, 0
    %292 = vmatpush.xpose.msra.mxu0 0.0
    %293 = vmatpush.xpose.msra.mxu0 0.0
    %294 = vmatpush.xpose.msra.mxu0 0.0
    %295 = vmatpush.xpose.msra.mxu0 0.0
    %296 = vmatpush.xpose.msra.mxu0 0.0
    %297 = vmatpush.xpose.msra.mxu0 0.0
    %298 = vmatpush.xpose.msra.mxu0 0.0
    %299 = vmatpush.xpose.msra.mxu0 0.0
    %300 = vmatpush.xpose.msra.mxu0 0.0
    %301 = vmatpush.xpose.msra.mxu0 0.0
    %302 = vmatpush.xpose.msra.mxu0 0.0
    %303 = vmatpush.xpose.msra.mxu0 0.0
    %304 = vmatpush.xpose.msra.mxu0 0.0
    %305 = vmatpush.xpose.msra.mxu0 0.0
    %306 = vmatpush.xpose.msra.mxu0 0.0
    %307 = vmatpush.xpose.msra.mxu0 %v290
    %308 = vmatmul.f32.gmra.mxu0 %v288
    %v309 = vpop.f32.mrf.mxu0
    %v310 = vadd.f32 %v65, %v309
    %311 = vdwg.mxu0
    %312 = vrot.lane.b32.xlu0 %v176, 96
    %v313 = vpop.permute.xlu0 %312
    %v314 = vsel %vm183, %v176, 0
    %v316 = vsel %vm183, %v313, 0
    %318 = vmatpush.xpose.msra.mxu0 0.0
    %319 = vmatpush.xpose.msra.mxu0 0.0
    %320 = vmatpush.xpose.msra.mxu0 0.0
    %321 = vmatpush.xpose.msra.mxu0 0.0
    %322 = vmatpush.xpose.msra.mxu0 0.0
    %323 = vmatpush.xpose.msra.mxu0 0.0
    %324 = vmatpush.xpose.msra.mxu0 0.0
    %325 = vmatpush.xpose.msra.mxu0 0.0
    %326 = vmatpush.xpose.msra.mxu0 0.0
    %327 = vmatpush.xpose.msra.mxu0 0.0
    %328 = vmatpush.xpose.msra.mxu0 0.0
    %329 = vmatpush.xpose.msra.mxu0 0.0
    %330 = vmatpush.xpose.msra.mxu0 0.0
    %331 = vmatpush.xpose.msra.mxu0 0.0
    %332 = vmatpush.xpose.msra.mxu0 0.0
    %333 = vmatpush.xpose.msra.mxu0 %v316
    %334 = vmatmul.f32.gmra.mxu0 %v314
    %v335 = vpop.f32.mrf.mxu0
    %v336 = vadd.f32 %v65, %v335
    %337 = vdwg.mxu0
    %338 = vrot.lane.b32.xlu0 %v178, 96
    %v339 = vpop.permute.xlu0 %338
    %v340 = vsel %vm183, %v178, 0
    %v342 = vsel %vm183, %v339, 0
    %344 = vmatpush.xpose.msra.mxu0 0.0
    %345 = vmatpush.xpose.msra.mxu0 0.0
    %346 = vmatpush.xpose.msra.mxu0 0.0
    %347 = vmatpush.xpose.msra.mxu0 0.0
    %348 = vmatpush.xpose.msra.mxu0 0.0
    %349 = vmatpush.xpose.msra.mxu0 0.0
    %350 = vmatpush.xpose.msra.mxu0 0.0
    %351 = vmatpush.xpose.msra.mxu0 0.0
    %352 = vmatpush.xpose.msra.mxu0 0.0
    %353 = vmatpush.xpose.msra.mxu0 0.0
    %354 = vmatpush.xpose.msra.mxu0 0.0
    %355 = vmatpush.xpose.msra.mxu0 0.0
    %356 = vmatpush.xpose.msra.mxu0 0.0
    %357 = vmatpush.xpose.msra.mxu0 0.0
    %358 = vmatpush.xpose.msra.mxu0 0.0
    %359 = vmatpush.xpose.msra.mxu0 %v342
    %360 = vmatmul.f32.gmra.mxu0 %v340
    %v361 = vpop.f32.mrf.mxu0
    %v362 = vadd.f32 %v65, %v361
    %363 = vdwg.mxu0
    %364 = vrot.lane.b32.xlu0 %v180, 96
    %v365 = vpop.permute.xlu0 %364
    %v366 = vsel %vm183, %v180, 0
    %v368 = vsel %vm183, %v365, 0
    %370 = vmatpush.xpose.msra.mxu0 0.0
    %371 = vmatpush.xpose.msra.mxu0 0.0
    %372 = vmatpush.xpose.msra.mxu0 0.0
    %373 = vmatpush.xpose.msra.mxu0 0.0
    %374 = vmatpush.xpose.msra.mxu0 0.0
    %375 = vmatpush.xpose.msra.mxu0 0.0
    %376 = vmatpush.xpose.msra.mxu0 0.0
    %377 = vmatpush.xpose.msra.mxu0 0.0
    %378 = vmatpush.xpose.msra.mxu0 0.0
    %379 = vmatpush.xpose.msra.mxu0 0.0
    %380 = vmatpush.xpose.msra.mxu0 0.0
    %381 = vmatpush.xpose.msra.mxu0 0.0
    %382 = vmatpush.xpose.msra.mxu0 0.0
    %383 = vmatpush.xpose.msra.mxu0 0.0
    %384 = vmatpush.xpose.msra.mxu0 0.0
    %385 = vmatpush.xpose.msra.mxu0 %v368
    %386 = vmatmul.f32.gmra.mxu0 %v366
    %v387 = vpop.f32.mrf.mxu0
    %v388 = vadd.f32 %v65, %v387
    %389 = vdwg.mxu0
    %v390 = vsel %vm183, %v206, -inf
    %391 = vmax.xlane.f32.xlu0 %v390
    %v392 = vpop.xlane.xlu0 %391
    %v393 = vsel %vm183, %v232, -inf
    %394 = vmax.xlane.f32.xlu0 %v393
    %v395 = vpop.xlane.xlu0 %394
    %v396 = vsel %vm183, %v258, -inf
    %397 = vmax.xlane.f32.xlu0 %v396
    %v398 = vpop.xlane.xlu0 %397
    %v399 = vsel %vm183, %v284, -inf
    %400 = vmax.xlane.f32.xlu0 %v399
    %v401 = vpop.xlane.xlu0 %400
    %v402 = vsel %vm183, %v310, -inf
    %403 = vmax.xlane.f32.xlu0 %v402
    %v404 = vpop.xlane.xlu0 %403
    %v405 = vsel %vm183, %v336, -inf
    %406 = vmax.xlane.f32.xlu0 %v405
    %v407 = vpop.xlane.xlu0 %406
    %v408 = vsel %vm183, %v362, -inf
    %409 = vmax.xlane.f32.xlu0 %v408
    %v410 = vpop.xlane.xlu0 %409
    %v411 = vsel %vm183, %v388, -inf
    %412 = vmax.xlane.f32.xlu0 %v411
    %v413 = vpop.xlane.xlu0 %412
    %v414 = vsub.f32 %v206, %v392
    %v415 = vsub.f32 %v232, %v395
    %v416 = vsub.f32 %v258, %v398
    %v417 = vsub.f32 %v284, %v401
    %v418 = vsub.f32 %v310, %v404
    %v419 = vsub.f32 %v336, %v407
    %v420 = vsub.f32 %v362, %v410
    %v421 = vsub.f32 %v388, %v413
    %v422 = vmul.f32 %v414, 1.442695
    %v423 = vpow.pop %v422
    %v424 = vmul.f32 %v415, 1.442695
    %v425 = vpow.pop %v424
    %v426 = vmul.f32 %v416, 1.442695
    %v427 = vpow.pop %v426
    %v428 = vmul.f32 %v417, 1.442695
    %v429 = vpow.pop %v428
    %v430 = vmul.f32 %v418, 1.442695
    %v431 = vpow.pop %v430
    %v432 = vmul.f32 %v419, 1.442695
    %v433 = vpow.pop %v432
    %v434 = vmul.f32 %v420, 1.442695
    %v435 = vpow.pop %v434
    %v436 = vmul.f32 %v421, 1.442695
    %v437 = vpow.pop %v436
    %v438 = vsel %vm183, %v423, 0.0
    %439 = vadd.xlane.f32.xlu0 %v438
    %v440 = vpop.xlane.xlu0 %439
    %v441 = vsel %vm183, %v425, 0.0
    %442 = vadd.xlane.f32.xlu0 %v441
    %v443 = vpop.xlane.xlu0 %442
    %v444 = vsel %vm183, %v427, 0.0
    %445 = vadd.xlane.f32.xlu0 %v444
    %v446 = vpop.xlane.xlu0 %445
    %v447 = vsel %vm183, %v429, 0.0
    %448 = vadd.xlane.f32.xlu0 %v447
    %v449 = vpop.xlane.xlu0 %448
    %v450 = vsel %vm183, %v431, 0.0
    %451 = vadd.xlane.f32.xlu0 %v450
    %v452 = vpop.xlane.xlu0 %451
    %v453 = vsel %vm183, %v433, 0.0
    %454 = vadd.xlane.f32.xlu0 %v453
    %v455 = vpop.xlane.xlu0 %454
    %v456 = vsel %vm183, %v435, 0.0
    %457 = vadd.xlane.f32.xlu0 %v456
    %v458 = vpop.xlane.xlu0 %457
    %v459 = vsel %vm183, %v437, 0.0
    %460 = vadd.xlane.f32.xlu0 %v459
    %v461 = vpop.xlane.xlu0 %460
    %v462 = vrcp.pop %v440
    %v463 = vrcp.pop %v443
    %v464 = vrcp.pop %v446
    %v465 = vrcp.pop %v449
    %v466 = vrcp.pop %v452
    %v467 = vrcp.pop %v455
    %v468 = vrcp.pop %v458
    %v469 = vrcp.pop %v461
    %v470 = vmul.f32 %v423, %v462
    %v471 = vmul.f32 %v425, %v463
    %v472 = vmul.f32 %v427, %v464
    %v473 = vmul.f32 %v429, %v465
    %v474 = vmul.f32 %v431, %v466
    %v475 = vmul.f32 %v433, %v467
    %v476 = vmul.f32 %v435, %v468
    %v477 = vmul.f32 %v437, %v469
    %478 = vrot.lane.b32.xlu0 %v162, 64
    %v479 = vpop.permute.xlu0 %478
    %v482 = vsel %vm183, %v470, 0
    %484 = vmatpush.msra.mxu0 0.0
    %485 = vmatpush.msra.mxu0 0.0
    %486 = vmatpush.msra.mxu0 0.0
    %487 = vmatpush.msra.mxu0 0.0
    %488 = vmatpush.msra.mxu0 0.0
    %489 = vmatpush.msra.mxu0 0.0
    %490 = vmatpush.msra.mxu0 0.0
    %491 = vmatpush.msra.mxu0 0.0
    %492 = vmatpush.msra.mxu0 0.0
    %493 = vmatpush.msra.mxu0 0.0
    %494 = vmatpush.msra.mxu0 0.0
    %495 = vmatpush.msra.mxu0 0.0
    %496 = vmatpush.msra.mxu0 0.0
    %497 = vmatpush.msra.mxu0 0.0
    %498 = vmatpush.msra.mxu0 0.0
    %499 = vmatpush.msra.mxu0 %v479
    %500 = vmatmul.f32.gmra.mxu0 %v482
    %v501 = vpop.f32.mrf.mxu0
    %v502 = vadd.f32 0.0, %v501
    %503 = vdwg.mxu0
    %504 = vrot.lane.b32.xlu0 %v165, 64
    %v505 = vpop.permute.xlu0 %504
    %v508 = vsel %vm183, %v471, 0
    %510 = vmatpush.msra.mxu0 0.0
    %511 = vmatpush.msra.mxu0 0.0
    %512 = vmatpush.msra.mxu0 0.0
    %513 = vmatpush.msra.mxu0 0.0
    %514 = vmatpush.msra.mxu0 0.0
    %515 = vmatpush.msra.mxu0 0.0
    %516 = vmatpush.msra.mxu0 0.0
    %517 = vmatpush.msra.mxu0 0.0
    %518 = vmatpush.msra.mxu0 0.0
    %519 = vmatpush.msra.mxu0 0.0
    %520 = vmatpush.msra.mxu0 0.0
    %521 = vmatpush.msra.mxu0 0.0
    %522 = vmatpush.msra.mxu0 0.0
    %523 = vmatpush.msra.mxu0 0.0
    %524 = vmatpush.msra.mxu0 0.0
    %525 = vmatpush.msra.mxu0 %v505
    %526 = vmatmul.f32.gmra.mxu0 %v508
    %v527 = vpop.f32.mrf.mxu0
    %v528 = vadd.f32 0.0, %v527
    %529 = vdwg.mxu0
    %530 = vrot.lane.b32.xlu0 %v170, 64
    %v531 = vpop.permute.xlu0 %530
    %v534 = vsel %vm183, %v472, 0
    %536 = vmatpush.msra.mxu0 0.0
    %537 = vmatpush.msra.mxu0 0.0
    %538 = vmatpush.msra.mxu0 0.0
    %539 = vmatpush.msra.mxu0 0.0
    %540 = vmatpush.msra.mxu0 0.0
    %541 = vmatpush.msra.mxu0 0.0
    %542 = vmatpush.msra.mxu0 0.0
    %543 = vmatpush.msra.mxu0 0.0
    %544 = vmatpush.msra.mxu0 0.0
    %545 = vmatpush.msra.mxu0 0.0
    %546 = vmatpush.msra.mxu0 0.0
    %547 = vmatpush.msra.mxu0 0.0
    %548 = vmatpush.msra.mxu0 0.0
    %549 = vmatpush.msra.mxu0 0.0
    %550 = vmatpush.msra.mxu0 0.0
    %551 = vmatpush.msra.mxu0 %v531
    %552 = vmatmul.f32.gmra.mxu0 %v534
    %v553 = vpop.f32.mrf.mxu0
    %v554 = vadd.f32 0.0, %v553
    %555 = vdwg.mxu0
    %556 = vrot.lane.b32.xlu0 %v172, 64
    %v557 = vpop.permute.xlu0 %556
    %v560 = vsel %vm183, %v473, 0
    %562 = vmatpush.msra.mxu0 0.0
    %563 = vmatpush.msra.mxu0 0.0
    %564 = vmatpush.msra.mxu0 0.0
    %565 = vmatpush.msra.mxu0 0.0
    %566 = vmatpush.msra.mxu0 0.0
    %567 = vmatpush.msra.mxu0 0.0
    %568 = vmatpush.msra.mxu0 0.0
    %569 = vmatpush.msra.mxu0 0.0
    %570 = vmatpush.msra.mxu0 0.0
    %571 = vmatpush.msra.mxu0 0.0
    %572 = vmatpush.msra.mxu0 0.0
    %573 = vmatpush.msra.mxu0 0.0
    %574 = vmatpush.msra.mxu0 0.0
    %575 = vmatpush.msra.mxu0 0.0
    %576 = vmatpush.msra.mxu0 0.0
    %577 = vmatpush.msra.mxu0 %v557
    %578 = vmatmul.f32.gmra.mxu0 %v560
    %v579 = vpop.f32.mrf.mxu0
    %v580 = vadd.f32 0.0, %v579
    %581 = vdwg.mxu0
    %582 = vrot.lane.b32.xlu0 %v174, 64
    %v583 = vpop.permute.xlu0 %582
    %v586 = vsel %vm183, %v474, 0
    %588 = vmatpush.msra.mxu0 0.0
    %589 = vmatpush.msra.mxu0 0.0
    %590 = vmatpush.msra.mxu0 0.0
    %591 = vmatpush.msra.mxu0 0.0
    %592 = vmatpush.msra.mxu0 0.0
    %593 = vmatpush.msra.mxu0 0.0
    %594 = vmatpush.msra.mxu0 0.0
    %595 = vmatpush.msra.mxu0 0.0
    %596 = vmatpush.msra.mxu0 0.0
    %597 = vmatpush.msra.mxu0 0.0
    %598 = vmatpush.msra.mxu0 0.0
    %599 = vmatpush.msra.mxu0 0.0
    %600 = vmatpush.msra.mxu0 0.0
    %601 = vmatpush.msra.mxu0 0.0
    %602 = vmatpush.msra.mxu0 0.0
    %603 = vmatpush.msra.mxu0 %v583
    %604 = vmatmul.f32.gmra.mxu0 %v586
    %v605 = vpop.f32.mrf.mxu0
    %v606 = vadd.f32 0.0, %v605
    %607 = vdwg.mxu0
    %608 = vrot.lane.b32.xlu0 %v176, 64
    %v609 = vpop.permute.xlu0 %608
    %v612 = vsel %vm183, %v475, 0
    %614 = vmatpush.msra.mxu0 0.0
    %615 = vmatpush.msra.mxu0 0.0
    %616 = vmatpush.msra.mxu0 0.0
    %617 = vmatpush.msra.mxu0 0.0
    %618 = vmatpush.msra.mxu0 0.0
    %619 = vmatpush.msra.mxu0 0.0
    %620 = vmatpush.msra.mxu0 0.0
    %621 = vmatpush.msra.mxu0 0.0
    %622 = vmatpush.msra.mxu0 0.0
    %623 = vmatpush.msra.mxu0 0.0
    %624 = vmatpush.msra.mxu0 0.0
    %625 = vmatpush.msra.mxu0 0.0
    %626 = vmatpush.msra.mxu0 0.0
    %627 = vmatpush.msra.mxu0 0.0
    %628 = vmatpush.msra.mxu0 0.0
    %629 = vmatpush.msra.mxu0 %v609
    %630 = vmatmul.f32.gmra.mxu0 %v612
    %v631 = vpop.f32.mrf.mxu0
    %v632 = vadd.f32 0.0, %v631
    %633 = vdwg.mxu0
    %634 = vrot.lane.b32.xlu0 %v178, 64
    %v635 = vpop.permute.xlu0 %634
    %v638 = vsel %vm183, %v476, 0
    %640 = vmatpush.msra.mxu0 0.0
    %641 = vmatpush.msra.mxu0 0.0
    %642 = vmatpush.msra.mxu0 0.0
    %643 = vmatpush.msra.mxu0 0.0
    %644 = vmatpush.msra.mxu0 0.0
    %645 = vmatpush.msra.mxu0 0.0
    %646 = vmatpush.msra.mxu0 0.0
    %647 = vmatpush.msra.mxu0 0.0
    %648 = vmatpush.msra.mxu0 0.0
    %649 = vmatpush.msra.mxu0 0.0
    %650 = vmatpush.msra.mxu0 0.0
    %651 = vmatpush.msra.mxu0 0.0
    %652 = vmatpush.msra.mxu0 0.0
    %653 = vmatpush.msra.mxu0 0.0
    %654 = vmatpush.msra.mxu0 0.0
    %655 = vmatpush.msra.mxu0 %v635
    %656 = vmatmul.f32.gmra.mxu0 %v638
    %v657 = vpop.f32.mrf.mxu0
    %v658 = vadd.f32 0.0, %v657
    %659 = vdwg.mxu0
    %660 = vrot.lane.b32.xlu0 %v180, 64
    %v661 = vpop.permute.xlu0 %660
    %v664 = vsel %vm183, %v477, 0
    %666 = vmatpush.msra.mxu0 0.0
    %667 = vmatpush.msra.mxu0 0.0
    %668 = vmatpush.msra.mxu0 0.0
    %669 = vmatpush.msra.mxu0 0.0
    %670 = vmatpush.msra.mxu0 0.0
    %671 = vmatpush.msra.mxu0 0.0
    %672 = vmatpush.msra.mxu0 0.0
    %673 = vmatpush.msra.mxu0 0.0
    %674 = vmatpush.msra.mxu0 0.0
    %675 = vmatpush.msra.mxu0 0.0
    %676 = vmatpush.msra.mxu0 0.0
    %677 = vmatpush.msra.mxu0 0.0
    %678 = vmatpush.msra.mxu0 0.0
    %679 = vmatpush.msra.mxu0 0.0
    %680 = vmatpush.msra.mxu0 0.0
    %681 = vmatpush.msra.mxu0 %v661
    %682 = vmatmul.f32.gmra.mxu0 %v664
    %v683 = vpop.f32.mrf.mxu0
    %v684 = vadd.f32 0.0, %v683
    %685 = vdwg.mxu0
    %688 = vrot.lane.b32.xlu0 %v554, 8
    %v689 = vpop.permute.xlu0 %688
    %690 = vrot.lane.b32.xlu0 %v580, 8
    %v691 = vpop.permute.xlu0 %690
    %696 = vrot.lane.b32.xlu0 %v606, 16
    %v697 = vpop.permute.xlu0 %696
    %698 = vrot.lane.b32.xlu0 %v632, 16
    %v699 = vpop.permute.xlu0 %698
    %704 = vrot.lane.b32.xlu0 %v658, 24
    %v705 = vpop.permute.xlu0 %704
    %706 = vrot.lane.b32.xlu0 %v684, 24
    %v707 = vpop.permute.xlu0 %706
    %v710 = vsel %vm183, %v502, %v689
    %v711 = vsel %vm183, %v528, %v691
    %vm712 = vcmask 130048
    %v713 = vsel %vm712, %v710, %v697
    %v714 = vsel %vm712, %v711, %v699
    %vm715 = vcmask 195584
    %v716 = vsel %vm715, %v713, %v705
    %v717 = vsel %vm715, %v714, %v707
    %v718 = vld [vmem:[%s7] sm:$0xff]
    %v719 = vld [vmem:[%s7 + $0x8] sm:$0xff]
    %v720 = vld [vmem:[%s7 + $0x10] sm:$0xff]
    %v721 = vld [vmem:[%s7 + $0x18] sm:$0xff]
    %v723 = vsel %vm68, %v716, 0
    %v726 = vsel %vm68, %v717, 0
    %728 = vmatpush.msra.mxu0 0.0
    %729 = vmatpush.msra.mxu0 0.0
    %730 = vmatpush.msra.mxu0 0.0
    %731 = vmatpush.msra.mxu0 0.0
    %732 = vmatpush.msra.mxu0 0.0
    %733 = vmatpush.msra.mxu0 0.0
    %734 = vmatpush.msra.mxu0 0.0
    %735 = vmatpush.msra.mxu0 0.0
    %736 = vmatpush.msra.mxu0 0.0
    %737 = vmatpush.msra.mxu0 0.0
    %738 = vmatpush.msra.mxu0 0.0
    %739 = vmatpush.msra.mxu0 0.0
    %740 = vmatpush.msra.mxu0 %v721
    %741 = vmatpush.msra.mxu0 %v720
    %742 = vmatpush.msra.mxu0 %v719
    %743 = vmatpush.msra.mxu0 %v718
    %744 = vmatmul.f32.gmra.mxu0 %v723
    %v745 = vpop.f32.mrf.mxu0
    %v746 = vadd.f32 0.0, %v745
    %747 = vmatmul.f32.gmra.mxu0 %v726
    %v748 = vpop.f32.mrf.mxu0
    %v749 = vadd.f32 0.0, %v748
    %750 = vdwg.mxu0
    %v751 = vadd.f32 %v63, %v746
    %v752 = vadd.f32 %v64, %v749
    %v753 = vld [vmem:[%s8] sm:$0x1]
    %v755 = vperm.slane %v753, 0
    %v757 = vadd.f32 %v751, %v755
    %v758 = vadd.f32 %v752, %v755
    %v759 = vld [vmem:[%s9] sm:$0x1]
    %v760 = vld [vmem:[%s10] sm:$0x1]
    %v761 = vsel %vm68, %v757, 0.0
    %762 = vadd.xlane.f32.xlu0 %v761
    %v763 = vpop.xlane.xlu0 %762
    %v764 = vsel %vm68, %v758, 0.0
    %765 = vadd.xlane.f32.xlu0 %v764
    %v766 = vpop.xlane.xlu0 %765
    %v767 = vmul.f32 %v763, %v81
    %v768 = vmul.f32 %v766, %v81
    %v769 = vsub.f32 %v757, %v767
    %v770 = vsub.f32 %v758, %v768
    %v771 = vmul.f32 %v769, %v769
    %v772 = vmul.f32 %v770, %v770
    %v773 = vsel %vm68, %v771, 0.0
    %774 = vadd.xlane.f32.xlu0 %v773
    %v775 = vpop.xlane.xlu0 %774
    %v776 = vsel %vm68, %v772, 0.0
    %777 = vadd.xlane.f32.xlu0 %v776
    %v778 = vpop.xlane.xlu0 %777
    %v779 = vmul.f32 %v775, %v81
    %v780 = vmul.f32 %v778, %v81
    %v781 = vadd.f32 %v779, 1e-05
    %v782 = vadd.f32 %v780, 1e-05
    %v783 = vrsqrt.pop %v781
    %v784 = vmul.f32 %v783, %v781
    %v785 = vmul.f32 %v784, %v783
    %v786 = vmul.f32 0.5, %v785
    %v787 = vsub.f32 1.5, %v786
    %v788 = vmul.f32 %v783, %v787
    %vm789 = vweird.f32 %v781
    %vm790 = vweird.f32 %v783
    %vm791 = vmor %vm789, %vm790
    %v792 = vsel %vm791, %v783, %v788
    %v793 = vrsqrt.pop %v782
    %v794 = vmul.f32 %v793, %v782
    %v795 = vmul.f32 %v794, %v793
    %v796 = vmul.f32 0.5, %v795
    %v797 = vsub.f32 1.5, %v796
    %v798 = vmul.f32 %v793, %v797
    %vm799 = vweird.f32 %v782
    %vm800 = vweird.f32 %v793
    %vm801 = vmor %vm799, %vm800
    %v802 = vsel %vm801, %v793, %v798
    %v803 = vmul.f32 %v769, %v792
    %v804 = vmul.f32 %v770, %v802
    %v806 = vperm.slane %v759, 0
    %v808 = vmul.f32 %v803, %v806
    %v809 = vmul.f32 %v804, %v806
    %v811 = vperm.slane %v760, 0
    %v813 = vadd.f32 %v808, %v811
    %v814 = vadd.f32 %v809, %v811
    %v815 = vld [vmem:[%s11] sm:$0xff]
    %v816 = vld [vmem:[%s11 + $0x8] sm:$0xff]
    %v817 = vld [vmem:[%s11 + $0x10] sm:$0xff]
    %v818 = vld [vmem:[%s11 + $0x18] sm:$0xff]
    %v819 = vld [vmem:[%s12] sm:$0x1]
    %v821 = vperm.slane %v819, 0
    %v824 = vsel %vm68, %v813, 0
    %v827 = vsel %vm68, %v814, 0
    %829 = vmatpush.msra.mxu0 0.0
    %830 = vmatpush.msra.mxu0 0.0
    %831 = vmatpush.msra.mxu0 0.0
    %832 = vmatpush.msra.mxu0 0.0
    %833 = vmatpush.msra.mxu0 0.0
    %834 = vmatpush.msra.mxu0 0.0
    %835 = vmatpush.msra.mxu0 0.0
    %836 = vmatpush.msra.mxu0 0.0
    %837 = vmatpush.msra.mxu0 0.0
    %838 = vmatpush.msra.mxu0 0.0
    %839 = vmatpush.msra.mxu0 0.0
    %840 = vmatpush.msra.mxu0 0.0
    %841 = vmatpush.msra.mxu0 %v818
    %842 = vmatpush.msra.mxu0 %v817
    %843 = vmatpush.msra.mxu0 %v816
    %844 = vmatpush.msra.mxu0 %v815
    %845 = vmatmul.f32.gmra.mxu0 %v824
    %v846 = vpop.f32.mrf.mxu0
    %v847 = vadd.f32 %v821, %v846
    %848 = vmatmul.f32.gmra.mxu0 %v827
    %v849 = vpop.f32.mrf.mxu0
    %v850 = vadd.f32 %v821, %v849
    %851 = vdwg.mxu0
    %v852 = vmul.f32 %v847, %v847
    %v853 = vmul.f32 %v850, %v850
    %v854 = vmul.f32 %v847, %v852
    %v855 = vmul.f32 %v850, %v853
    %v856 = vmul.f32 %v854, 0.044715
    %v857 = vmul.f32 %v855, 0.044715
    %v858 = vadd.f32 %v847, %v856
    %v859 = vadd.f32 %v850, %v857
    %v860 = vmul.f32 %v858, 0.7978846
    %v861 = vmul.f32 %v859, 0.7978846
    %v862 = vtanh.pop %v860
    %v863 = vtanh.pop %v861
    %v864 = vadd.f32 %v862, 1.0
    %v865 = vadd.f32 %v863, 1.0
    %v866 = vmul.f32 %v864, 0.5
    %v867 = vmul.f32 %v865, 0.5
    %v868 = vmul.f32 %v847, %v866
    %v869 = vmul.f32 %v850, %v867
    %v870 = vld [vmem:[%s13] sm:$0xff]
    %v871 = vld [vmem:[%s13 + $0x8] sm:$0xff]
    %v872 = vld [vmem:[%s13 + $0x10] sm:$0xff]
    %v873 = vld [vmem:[%s13 + $0x18] sm:$0xff]
    %v874 = vld [vmem:[%s13 + $0x20] sm:$0xff]
    %v875 = vld [vmem:[%s13 + $0x28] sm:$0xff]
    %v876 = vld [vmem:[%s13 + $0x30] sm:$0xff]
    %v877 = vld [vmem:[%s13 + $0x38] sm:$0xff]
    %v878 = vld [vmem:[%s13 + $0x40] sm:$0xff]
    %v879 = vld [vmem:[%s13 + $0x48] sm:$0xff]
    %v880 = vld [vmem:[%s13 + $0x50] sm:$0xff]
    %v881 = vld [vmem:[%s13 + $0x58] sm:$0xff]
    %v882 = vld [vmem:[%s13 + $0x60] sm:$0xff]
    %v883 = vld [vmem:[%s13 + $0x68] sm:$0xff]
    %v884 = vld [vmem:[%s13 + $0x70] sm:$0xff]
    %v885 = vld [vmem:[%s13 + $0x78] sm:$0xff]
    %886 = vmatpush.msra.mxu0 %v885
    %887 = vmatpush.msra.mxu0 %v884
    %888 = vmatpush.msra.mxu0 %v883
    %889 = vmatpush.msra.mxu0 %v882
    %890 = vmatpush.msra.mxu0 %v881
    %891 = vmatpush.msra.mxu0 %v880
    %892 = vmatpush.msra.mxu0 %v879
    %893 = vmatpush.msra.mxu0 %v878
    %894 = vmatpush.msra.mxu0 %v877
    %895 = vmatpush.msra.mxu0 %v876
    %896 = vmatpush.msra.mxu0 %v875
    %897 = vmatpush.msra.mxu0 %v874
    %898 = vmatpush.msra.mxu0 %v873
    %899 = vmatpush.msra.mxu0 %v872
    %900 = vmatpush.msra.mxu0 %v871
    %901 = vmatpush.msra.mxu0 %v870
    %902 = vmatmul.f32.gmra.mxu0 %v868
    %v903 = vpop.f32.mrf.mxu0
    %v904 = vadd.f32 0.0, %v903
    %905 = vmatmul.f32.gmra.mxu0 %v869
    %v906 = vpop.f32.mrf.mxu0
    %v907 = vadd.f32 0.0, %v906
    %908 = vdwg.mxu0
    %v909 = vadd.f32 %v757, %v904
    %v910 = vadd.f32 %v758, %v907
    %v911 = vld [vmem:[%s14] sm:$0x1]
    %v913 = vperm.slane %v911, 0
    %v915 = vadd.f32 %v909, %v913
    %v916 = vadd.f32 %v910, %v913
    %s917 = scalar_lea.vmem %s3, 1
    %v918 = vld [vmem:[%s917] sm:$0x1]
    %s919 = scalar_lea.vmem %s4, 1
    %v920 = vld [vmem:[%s919] sm:$0x1]
    %v921 = vsel %vm68, %v915, 0.0
    %922 = vadd.xlane.f32.xlu0 %v921
    %v923 = vpop.xlane.xlu0 %922
    %v924 = vsel %vm68, %v916, 0.0
    %925 = vadd.xlane.f32.xlu0 %v924
    %v926 = vpop.xlane.xlu0 %925
    %v927 = vmul.f32 %v923, %v81
    %v928 = vmul.f32 %v926, %v81
    %v929 = vsub.f32 %v915, %v927
    %v930 = vsub.f32 %v916, %v928
    %v931 = vmul.f32 %v929, %v929
    %v932 = vmul.f32 %v930, %v930
    %v933 = vsel %vm68, %v931, 0.0
    %934 = vadd.xlane.f32.xlu0 %v933
    %v935 = vpop.xlane.xlu0 %934
    %v936 = vsel %vm68, %v932, 0.0
    %937 = vadd.xlane.f32.xlu0 %v936
    %v938 = vpop.xlane.xlu0 %937
    %v939 = vmul.f32 %v935, %v81
    %v940 = vmul.f32 %v938, %v81
    %v941 = vadd.f32 %v939, 1e-05
    %v942 = vadd.f32 %v940, 1e-05
    %v943 = vrsqrt.pop %v941
    %v944 = vmul.f32 %v943, %v941
    %v945 = vmul.f32 %v944, %v943
    %v946 = vmul.f32 0.5, %v945
    %v947 = vsub.f32 1.5, %v946
    %v948 = vmul.f32 %v943, %v947
    %vm949 = vweird.f32 %v941
    %vm950 = vweird.f32 %v943
    %vm951 = vmor %vm949, %vm950
    %v952 = vsel %vm951, %v943, %v948
    %v953 = vrsqrt.pop %v942
    %v954 = vmul.f32 %v953, %v942
    %v955 = vmul.f32 %v954, %v953
    %v956 = vmul.f32 0.5, %v955
    %v957 = vsub.f32 1.5, %v956
    %v958 = vmul.f32 %v953, %v957
    %vm959 = vweird.f32 %v942
    %vm960 = vweird.f32 %v953
    %vm961 = vmor %vm959, %vm960
    %v962 = vsel %vm961, %v953, %v958
    %v963 = vmul.f32 %v929, %v952
    %v964 = vmul.f32 %v930, %v962
    %v966 = vperm.slane %v918, 0
    %v968 = vmul.f32 %v963, %v966
    %v969 = vmul.f32 %v964, %v966
    %v971 = vperm.slane %v920, 0
    %v973 = vadd.f32 %v968, %v971
    %v974 = vadd.f32 %v969, %v971
    %s975 = scalar_lea.vmem %s5, 32
    %v976 = vld [vmem:[%s975] sm:$0xff]
    %v977 = vld [vmem:[%s975 + $0x8] sm:$0xff]
    %v978 = vld [vmem:[%s975 + $0x10] sm:$0xff]
    %v979 = vld [vmem:[%s975 + $0x18] sm:$0xff]
    %s980 = scalar_lea.vmem %s6, 1
    %v981 = vld [vmem:[%s980] sm:$0x1]
    %v983 = vperm.slane %v981, 0
    %v986 = vsel %vm68, %v973, 0
    %v989 = vsel %vm68, %v974, 0
    %991 = vmatpush.msra.mxu0 0.0
    %992 = vmatpush.msra.mxu0 0.0
    %993 = vmatpush.msra.mxu0 0.0
    %994 = vmatpush.msra.mxu0 0.0
    %995 = vmatpush.msra.mxu0 0.0
    %996 = vmatpush.msra.mxu0 0.0
    %997 = vmatpush.msra.mxu0 0.0
    %998 = vmatpush.msra.mxu0 0.0
    %999 = vmatpush.msra.mxu0 0.0
    %1000 = vmatpush.msra.mxu0 0.0
    %1001 = vmatpush.msra.mxu0 0.0
    %1002 = vmatpush.msra.mxu0 0.0
    %1003 = vmatpush.msra.mxu0 %v979
    %1004 = vmatpush.msra.mxu0 %v978
    %1005 = vmatpush.msra.mxu0 %v977
    %1006 = vmatpush.msra.mxu0 %v976
    %1007 = vmatmul.f32.gmra.mxu0 %v986
    %v1008 = vpop.f32.mrf.mxu0
    %v1009 = vadd.f32 %v983, %v1008
    %1010 = vmatmul.f32.gmra.mxu0 %v989
    %v1011 = vpop.f32.mrf.mxu0
    %v1012 = vadd.f32 %v983, %v1011
    %1013 = vdwg.mxu0
    %1016 = vrot.lane.b32.xlu0 %v1009, 120
    %v1017 = vpop.permute.xlu0 %1016
    %1018 = vrot.lane.b32.xlu0 %v1012, 120
    %v1019 = vpop.permute.xlu0 %1018
    %1020 = vrot.lane.b32.xlu0 %v1009, 112
    %v1021 = vpop.permute.xlu0 %1020
    %1022 = vrot.lane.b32.xlu0 %v1012, 112
    %v1023 = vpop.permute.xlu0 %1022
    %1024 = vrot.lane.b32.xlu0 %v1009, 104
    %v1025 = vpop.permute.xlu0 %1024
    %1026 = vrot.lane.b32.xlu0 %v1012, 104
    %v1027 = vpop.permute.xlu0 %1026
    %1028 = vrot.lane.b32.xlu0 %v1009, 96
    %v1029 = vpop.permute.xlu0 %1028
    %v1030 = vsel %vm183, %v1009, 0
    %v1032 = vsel %vm183, %v1029, 0
    %1034 = vmatpush.xpose.msra.mxu0 0.0
    %1035 = vmatpush.xpose.msra.mxu0 0.0
    %1036 = vmatpush.xpose.msra.mxu0 0.0
    %1037 = vmatpush.xpose.msra.mxu0 0.0
    %1038 = vmatpush.xpose.msra.mxu0 0.0
    %1039 = vmatpush.xpose.msra.mxu0 0.0
    %1040 = vmatpush.xpose.msra.mxu0 0.0
    %1041 = vmatpush.xpose.msra.mxu0 0.0
    %1042 = vmatpush.xpose.msra.mxu0 0.0
    %1043 = vmatpush.xpose.msra.mxu0 0.0
    %1044 = vmatpush.xpose.msra.mxu0 0.0
    %1045 = vmatpush.xpose.msra.mxu0 0.0
    %1046 = vmatpush.xpose.msra.mxu0 0.0
    %1047 = vmatpush.xpose.msra.mxu0 0.0
    %1048 = vmatpush.xpose.msra.mxu0 0.0
    %1049 = vmatpush.xpose.msra.mxu0 %v1032
    %1050 = vmatmul.f32.gmra.mxu0 %v1030
    %v1051 = vpop.f32.mrf.mxu0
    %v1052 = vadd.f32 %v65, %v1051
    %1053 = vdwg.mxu0
    %1054 = vrot.lane.b32.xlu0 %v1012, 96
    %v1055 = vpop.permute.xlu0 %1054
    %v1056 = vsel %vm183, %v1012, 0
    %v1058 = vsel %vm183, %v1055, 0
    %1060 = vmatpush.xpose.msra.mxu0 0.0
    %1061 = vmatpush.xpose.msra.mxu0 0.0
    %1062 = vmatpush.xpose.msra.mxu0 0.0
    %1063 = vmatpush.xpose.msra.mxu0 0.0
    %1064 = vmatpush.xpose.msra.mxu0 0.0
    %1065 = vmatpush.xpose.msra.mxu0 0.0
    %1066 = vmatpush.xpose.msra.mxu0 0.0
    %1067 = vmatpush.xpose.msra.mxu0 0.0
    %1068 = vmatpush.xpose.msra.mxu0 0.0
    %1069 = vmatpush.xpose.msra.mxu0 0.0
    %1070 = vmatpush.xpose.msra.mxu0 0.0
    %1071 = vmatpush.xpose.msra.mxu0 0.0
    %1072 = vmatpush.xpose.msra.mxu0 0.0
    %1073 = vmatpush.xpose.msra.mxu0 0.0
    %1074 = vmatpush.xpose.msra.mxu0 0.0
    %1075 = vmatpush.xpose.msra.mxu0 %v1058
    %1076 = vmatmul.f32.gmra.mxu0 %v1056
    %v1077 = vpop.f32.mrf.mxu0
    %v1078 = vadd.f32 %v65, %v1077
    %1079 = vdwg.mxu0
    %1080 = vrot.lane.b32.xlu0 %v1017, 96
    %v1081 = vpop.permute.xlu0 %1080
    %v1082 = vsel %vm183, %v1017, 0
    %v1084 = vsel %vm183, %v1081, 0
    %1086 = vmatpush.xpose.msra.mxu0 0.0
    %1087 = vmatpush.xpose.msra.mxu0 0.0
    %1088 = vmatpush.xpose.msra.mxu0 0.0
    %1089 = vmatpush.xpose.msra.mxu0 0.0
    %1090 = vmatpush.xpose.msra.mxu0 0.0
    %1091 = vmatpush.xpose.msra.mxu0 0.0
    %1092 = vmatpush.xpose.msra.mxu0 0.0
    %1093 = vmatpush.xpose.msra.mxu0 0.0
    %1094 = vmatpush.xpose.msra.mxu0 0.0
    %1095 = vmatpush.xpose.msra.mxu0 0.0
    %1096 = vmatpush.xpose.msra.mxu0 0.0
    %1097 = vmatpush.xpose.msra.mxu0 0.0
    %1098 = vmatpush.xpose.msra.mxu0 0.0
    %1099 = vmatpush.xpose.msra.mxu0 0.0
    %1100 = vmatpush.xpose.msra.mxu0 0.0
    %1101 = vmatpush.xpose.msra.mxu0 %v1084
    %1102 = vmatmul.f32.gmra.mxu0 %v1082
    %v1103 = vpop.f32.mrf.mxu0
    %v1104 = vadd.f32 %v65, %v1103
    %1105 = vdwg.mxu0
    %1106 = vrot.lane.b32.xlu0 %v1019, 96
    %v1107 = vpop.permute.xlu0 %1106
    %v1108 = vsel %vm183, %v1019, 0
    %v1110 = vsel %vm183, %v1107, 0
    %1112 = vmatpush.xpose.msra.mxu0 0.0
    %1113 = vmatpush.xpose.msra.mxu0 0.0
    %1114 = vmatpush.xpose.msra.mxu0 0.0
    %1115 = vmatpush.xpose.msra.mxu0 0.0
    %1116 = vmatpush.xpose.msra.mxu0 0.0
    %1117 = vmatpush.xpose.msra.mxu0 0.0
    %1118 = vmatpush.xpose.msra.mxu0 0.0
    %1119 = vmatpush.xpose.msra.mxu0 0.0
    %1120 = vmatpush.xpose.msra.mxu0 0.0
    %1121 = vmatpush.xpose.msra.mxu0 0.0
    %1122 = vmatpush.xpose.msra.mxu0 0.0
    %1123 = vmatpush.xpose.msra.mxu0 0.0
    %1124 = vmatpush.xpose.msra.mxu0 0.0
    %1125 = vmatpush.xpose.msra.mxu0 0.0
    %1126 = vmatpush.xpose.msra.mxu0 0.0
    %1127 = vmatpush.xpose.msra.mxu0 %v1110
    %1128 = vmatmul.f32.gmra.mxu0 %v1108
    %v1129 = vpop.f32.mrf.mxu0
    %v1130 = vadd.f32 %v65, %v1129
    %1131 = vdwg.mxu0
    %1132 = vrot.lane.b32.xlu0 %v1021, 96
    %v1133 = vpop.permute.xlu0 %1132
    %v1134 = vsel %vm183, %v1021, 0
    %v1136 = vsel %vm183, %v1133, 0
    %1138 = vmatpush.xpose.msra.mxu0 0.0
    %1139 = vmatpush.xpose.msra.mxu0 0.0
    %1140 = vmatpush.xpose.msra.mxu0 0.0
    %1141 = vmatpush.xpose.msra.mxu0 0.0
    %1142 = vmatpush.xpose.msra.mxu0 0.0
    %1143 = vmatpush.xpose.msra.mxu0 0.0
    %1144 = vmatpush.xpose.msra.mxu0 0.0
    %1145 = vmatpush.xpose.msra.mxu0 0.0
    %1146 = vmatpush.xpose.msra.mxu0 0.0
    %1147 = vmatpush.xpose.msra.mxu0 0.0
    %1148 = vmatpush.xpose.msra.mxu0 0.0
    %1149 = vmatpush.xpose.msra.mxu0 0.0
    %1150 = vmatpush.xpose.msra.mxu0 0.0
    %1151 = vmatpush.xpose.msra.mxu0 0.0
    %1152 = vmatpush.xpose.msra.mxu0 0.0
    %1153 = vmatpush.xpose.msra.mxu0 %v1136
    %1154 = vmatmul.f32.gmra.mxu0 %v1134
    %v1155 = vpop.f32.mrf.mxu0
    %v1156 = vadd.f32 %v65, %v1155
    %1157 = vdwg.mxu0
    %1158 = vrot.lane.b32.xlu0 %v1023, 96
    %v1159 = vpop.permute.xlu0 %1158
    %v1160 = vsel %vm183, %v1023, 0
    %v1162 = vsel %vm183, %v1159, 0
    %1164 = vmatpush.xpose.msra.mxu0 0.0
    %1165 = vmatpush.xpose.msra.mxu0 0.0
    %1166 = vmatpush.xpose.msra.mxu0 0.0
    %1167 = vmatpush.xpose.msra.mxu0 0.0
    %1168 = vmatpush.xpose.msra.mxu0 0.0
    %1169 = vmatpush.xpose.msra.mxu0 0.0
    %1170 = vmatpush.xpose.msra.mxu0 0.0
    %1171 = vmatpush.xpose.msra.mxu0 0.0
    %1172 = vmatpush.xpose.msra.mxu0 0.0
    %1173 = vmatpush.xpose.msra.mxu0 0.0
    %1174 = vmatpush.xpose.msra.mxu0 0.0
    %1175 = vmatpush.xpose.msra.mxu0 0.0
    %1176 = vmatpush.xpose.msra.mxu0 0.0
    %1177 = vmatpush.xpose.msra.mxu0 0.0
    %1178 = vmatpush.xpose.msra.mxu0 0.0
    %1179 = vmatpush.xpose.msra.mxu0 %v1162
    %1180 = vmatmul.f32.gmra.mxu0 %v1160
    %v1181 = vpop.f32.mrf.mxu0
    %v1182 = vadd.f32 %v65, %v1181
    %1183 = vdwg.mxu0
    %1184 = vrot.lane.b32.xlu0 %v1025, 96
    %v1185 = vpop.permute.xlu0 %1184
    %v1186 = vsel %vm183, %v1025, 0
    %v1188 = vsel %vm183, %v1185, 0
    %1190 = vmatpush.xpose.msra.mxu0 0.0
    %1191 = vmatpush.xpose.msra.mxu0 0.0
    %1192 = vmatpush.xpose.msra.mxu0 0.0
    %1193 = vmatpush.xpose.msra.mxu0 0.0
    %1194 = vmatpush.xpose.msra.mxu0 0.0
    %1195 = vmatpush.xpose.msra.mxu0 0.0
    %1196 = vmatpush.xpose.msra.mxu0 0.0
    %1197 = vmatpush.xpose.msra.mxu0 0.0
    %1198 = vmatpush.xpose.msra.mxu0 0.0
    %1199 = vmatpush.xpose.msra.mxu0 0.0
    %1200 = vmatpush.xpose.msra.mxu0 0.0
    %1201 = vmatpush.xpose.msra.mxu0 0.0
    %1202 = vmatpush.xpose.msra.mxu0 0.0
    %1203 = vmatpush.xpose.msra.mxu0 0.0
    %1204 = vmatpush.xpose.msra.mxu0 0.0
    %1205 = vmatpush.xpose.msra.mxu0 %v1188
    %1206 = vmatmul.f32.gmra.mxu0 %v1186
    %v1207 = vpop.f32.mrf.mxu0
    %v1208 = vadd.f32 %v65, %v1207
    %1209 = vdwg.mxu0
    %1210 = vrot.lane.b32.xlu0 %v1027, 96
    %v1211 = vpop.permute.xlu0 %1210
    %v1212 = vsel %vm183, %v1027, 0
    %v1214 = vsel %vm183, %v1211, 0
    %1216 = vmatpush.xpose.msra.mxu0 0.0
    %1217 = vmatpush.xpose.msra.mxu0 0.0
    %1218 = vmatpush.xpose.msra.mxu0 0.0
    %1219 = vmatpush.xpose.msra.mxu0 0.0
    %1220 = vmatpush.xpose.msra.mxu0 0.0
    %1221 = vmatpush.xpose.msra.mxu0 0.0
    %1222 = vmatpush.xpose.msra.mxu0 0.0
    %1223 = vmatpush.xpose.msra.mxu0 0.0
    %1224 = vmatpush.xpose.msra.mxu0 0.0
    %1225 = vmatpush.xpose.msra.mxu0 0.0
    %1226 = vmatpush.xpose.msra.mxu0 0.0
    %1227 = vmatpush.xpose.msra.mxu0 0.0
    %1228 = vmatpush.xpose.msra.mxu0 0.0
    %1229 = vmatpush.xpose.msra.mxu0 0.0
    %1230 = vmatpush.xpose.msra.mxu0 0.0
    %1231 = vmatpush.xpose.msra.mxu0 %v1214
    %1232 = vmatmul.f32.gmra.mxu0 %v1212
    %v1233 = vpop.f32.mrf.mxu0
    %v1234 = vadd.f32 %v65, %v1233
    %1235 = vdwg.mxu0
    %v1236 = vsel %vm183, %v1052, -inf
    %1237 = vmax.xlane.f32.xlu0 %v1236
    %v1238 = vpop.xlane.xlu0 %1237
    %v1239 = vsel %vm183, %v1078, -inf
    %1240 = vmax.xlane.f32.xlu0 %v1239
    %v1241 = vpop.xlane.xlu0 %1240
    %v1242 = vsel %vm183, %v1104, -inf
    %1243 = vmax.xlane.f32.xlu0 %v1242
    %v1244 = vpop.xlane.xlu0 %1243
    %v1245 = vsel %vm183, %v1130, -inf
    %1246 = vmax.xlane.f32.xlu0 %v1245
    %v1247 = vpop.xlane.xlu0 %1246
    %v1248 = vsel %vm183, %v1156, -inf
    %1249 = vmax.xlane.f32.xlu0 %v1248
    %v1250 = vpop.xlane.xlu0 %1249
    %v1251 = vsel %vm183, %v1182, -inf
    %1252 = vmax.xlane.f32.xlu0 %v1251
    %v1253 = vpop.xlane.xlu0 %1252
    %v1254 = vsel %vm183, %v1208, -inf
    %1255 = vmax.xlane.f32.xlu0 %v1254
    %v1256 = vpop.xlane.xlu0 %1255
    %v1257 = vsel %vm183, %v1234, -inf
    %1258 = vmax.xlane.f32.xlu0 %v1257
    %v1259 = vpop.xlane.xlu0 %1258
    %v1260 = vsub.f32 %v1052, %v1238
    %v1261 = vsub.f32 %v1078, %v1241
    %v1262 = vsub.f32 %v1104, %v1244
    %v1263 = vsub.f32 %v1130, %v1247
    %v1264 = vsub.f32 %v1156, %v1250
    %v1265 = vsub.f32 %v1182, %v1253
    %v1266 = vsub.f32 %v1208, %v1256
    %v1267 = vsub.f32 %v1234, %v1259
    %v1268 = vmul.f32 %v1260, 1.442695
    %v1269 = vpow.pop %v1268
    %v1270 = vmul.f32 %v1261, 1.442695
    %v1271 = vpow.pop %v1270
    %v1272 = vmul.f32 %v1262, 1.442695
    %v1273 = vpow.pop %v1272
    %v1274 = vmul.f32 %v1263, 1.442695
    %v1275 = vpow.pop %v1274
    %v1276 = vmul.f32 %v1264, 1.442695
    %v1277 = vpow.pop %v1276
    %v1278 = vmul.f32 %v1265, 1.442695
    %v1279 = vpow.pop %v1278
    %v1280 = vmul.f32 %v1266, 1.442695
    %v1281 = vpow.pop %v1280
    %v1282 = vmul.f32 %v1267, 1.442695
    %v1283 = vpow.pop %v1282
    %v1284 = vsel %vm183, %v1269, 0.0
    %1285 = vadd.xlane.f32.xlu0 %v1284
    %v1286 = vpop.xlane.xlu0 %1285
    %v1287 = vsel %vm183, %v1271, 0.0
    %1288 = vadd.xlane.f32.xlu0 %v1287
    %v1289 = vpop.xlane.xlu0 %1288
    %v1290 = vsel %vm183, %v1273, 0.0
    %1291 = vadd.xlane.f32.xlu0 %v1290
    %v1292 = vpop.xlane.xlu0 %1291
    %v1293 = vsel %vm183, %v1275, 0.0
    %1294 = vadd.xlane.f32.xlu0 %v1293
    %v1295 = vpop.xlane.xlu0 %1294
    %v1296 = vsel %vm183, %v1277, 0.0
    %1297 = vadd.xlane.f32.xlu0 %v1296
    %v1298 = vpop.xlane.xlu0 %1297
    %v1299 = vsel %vm183, %v1279, 0.0
    %1300 = vadd.xlane.f32.xlu0 %v1299
    %v1301 = vpop.xlane.xlu0 %1300
    %v1302 = vsel %vm183, %v1281, 0.0
    %1303 = vadd.xlane.f32.xlu0 %v1302
    %v1304 = vpop.xlane.xlu0 %1303
    %v1305 = vsel %vm183, %v1283, 0.0
    %1306 = vadd.xlane.f32.xlu0 %v1305
    %v1307 = vpop.xlane.xlu0 %1306
    %v1308 = vrcp.pop %v1286
    %v1309 = vrcp.pop %v1289
    %v1310 = vrcp.pop %v1292
    %v1311 = vrcp.pop %v1295
    %v1312 = vrcp.pop %v1298
    %v1313 = vrcp.pop %v1301
    %v1314 = vrcp.pop %v1304
    %v1315 = vrcp.pop %v1307
    %v1316 = vmul.f32 %v1269, %v1308
    %v1317 = vmul.f32 %v1271, %v1309
    %v1318 = vmul.f32 %v1273, %v1310
    %v1319 = vmul.f32 %v1275, %v1311
    %v1320 = vmul.f32 %v1277, %v1312
    %v1321 = vmul.f32 %v1279, %v1313
    %v1322 = vmul.f32 %v1281, %v1314
    %v1323 = vmul.f32 %v1283, %v1315
    %1324 = vrot.lane.b32.xlu0 %v1009, 64
    %v1325 = vpop.permute.xlu0 %1324
    %v1328 = vsel %vm183, %v1316, 0
    %1330 = vmatpush.msra.mxu0 0.0
    %1331 = vmatpush.msra.mxu0 0.0
    %1332 = vmatpush.msra.mxu0 0.0
    %1333 = vmatpush.msra.mxu0 0.0
    %1334 = vmatpush.msra.mxu0 0.0
    %1335 = vmatpush.msra.mxu0 0.0
    %1336 = vmatpush.msra.mxu0 0.0
    %1337 = vmatpush.msra.mxu0 0.0
    %1338 = vmatpush.msra.mxu0 0.0
    %1339 = vmatpush.msra.mxu0 0.0
    %1340 = vmatpush.msra.mxu0 0.0
    %1341 = vmatpush.msra.mxu0 0.0
    %1342 = vmatpush.msra.mxu0 0.0
    %1343 = vmatpush.msra.mxu0 0.0
    %1344 = vmatpush.msra.mxu0 0.0
    %1345 = vmatpush.msra.mxu0 %v1325
    %1346 = vmatmul.f32.gmra.mxu0 %v1328
    %v1347 = vpop.f32.mrf.mxu0
    %v1348 = vadd.f32 0.0, %v1347
    %1349 = vdwg.mxu0
    %1350 = vrot.lane.b32.xlu0 %v1012, 64
    %v1351 = vpop.permute.xlu0 %1350
    %v1354 = vsel %vm183, %v1317, 0
    %1356 = vmatpush.msra.mxu0 0.0
    %1357 = vmatpush.msra.mxu0 0.0
    %1358 = vmatpush.msra.mxu0 0.0
    %1359 = vmatpush.msra.mxu0 0.0
    %1360 = vmatpush.msra.mxu0 0.0
    %1361 = vmatpush.msra.mxu0 0.0
    %1362 = vmatpush.msra.mxu0 0.0
    %1363 = vmatpush.msra.mxu0 0.0
    %1364 = vmatpush.msra.mxu0 0.0
    %1365 = vmatpush.msra.mxu0 0.0
    %1366 = vmatpush.msra.mxu0 0.0
    %1367 = vmatpush.msra.mxu0 0.0
    %1368 = vmatpush.msra.mxu0 0.0
    %1369 = vmatpush.msra.mxu0 0.0
    %1370 = vmatpush.msra.mxu0 0.0
    %1371 = vmatpush.msra.mxu0 %v1351
    %1372 = vmatmul.f32.gmra.mxu0 %v1354
    %v1373 = vpop.f32.mrf.mxu0
    %v1374 = vadd.f32 0.0, %v1373
    %1375 = vdwg.mxu0
    %1376 = vrot.lane.b32.xlu0 %v1017, 64
    %v1377 = vpop.permute.xlu0 %1376
    %v1380 = vsel %vm183, %v1318, 0
    %1382 = vmatpush.msra.mxu0 0.0
    %1383 = vmatpush.msra.mxu0 0.0
    %1384 = vmatpush.msra.mxu0 0.0
    %1385 = vmatpush.msra.mxu0 0.0
    %1386 = vmatpush.msra.mxu0 0.0
    %1387 = vmatpush.msra.mxu0 0.0
    %1388 = vmatpush.msra.mxu0 0.0
    %1389 = vmatpush.msra.mxu0 0.0
    %1390 = vmatpush.msra.mxu0 0.0
    %1391 = vmatpush.msra.mxu0 0.0
    %1392 = vmatpush.msra.mxu0 0.0
    %1393 = vmatpush.msra.mxu0 0.0
    %1394 = vmatpush.msra.mxu0 0.0
    %1395 = vmatpush.msra.mxu0 0.0
    %1396 = vmatpush.msra.mxu0 0.0
    %1397 = vmatpush.msra.mxu0 %v1377
    %1398 = vmatmul.f32.gmra.mxu0 %v1380
    %v1399 = vpop.f32.mrf.mxu0
    %v1400 = vadd.f32 0.0, %v1399
    %1401 = vdwg.mxu0
    %1402 = vrot.lane.b32.xlu0 %v1019, 64
    %v1403 = vpop.permute.xlu0 %1402
    %v1406 = vsel %vm183, %v1319, 0
    %1408 = vmatpush.msra.mxu0 0.0
    %1409 = vmatpush.msra.mxu0 0.0
    %1410 = vmatpush.msra.mxu0 0.0
    %1411 = vmatpush.msra.mxu0 0.0
    %1412 = vmatpush.msra.mxu0 0.0
    %1413 = vmatpush.msra.mxu0 0.0
    %1414 = vmatpush.msra.mxu0 0.0
    %1415 = vmatpush.msra.mxu0 0.0
    %1416 = vmatpush.msra.mxu0 0.0
    %1417 = vmatpush.msra.mxu0 0.0
    %1418 = vmatpush.msra.mxu0 0.0
    %1419 = vmatpush.msra.mxu0 0.0
    %1420 = vmatpush.msra.mxu0 0.0
    %1421 = vmatpush.msra.mxu0 0.0
    %1422 = vmatpush.msra.mxu0 0.0
    %1423 = vmatpush.msra.mxu0 %v1403
    %1424 = vmatmul.f32.gmra.mxu0 %v1406
    %v1425 = vpop.f32.mrf.mxu0
    %v1426 = vadd.f32 0.0, %v1425
    %1427 = vdwg.mxu0
    %1428 = vrot.lane.b32.xlu0 %v1021, 64
    %v1429 = vpop.permute.xlu0 %1428
    %v1432 = vsel %vm183, %v1320, 0
    %1434 = vmatpush.msra.mxu0 0.0
    %1435 = vmatpush.msra.mxu0 0.0
    %1436 = vmatpush.msra.mxu0 0.0
    %1437 = vmatpush.msra.mxu0 0.0
    %1438 = vmatpush.msra.mxu0 0.0
    %1439 = vmatpush.msra.mxu0 0.0
    %1440 = vmatpush.msra.mxu0 0.0
    %1441 = vmatpush.msra.mxu0 0.0
    %1442 = vmatpush.msra.mxu0 0.0
    %1443 = vmatpush.msra.mxu0 0.0
    %1444 = vmatpush.msra.mxu0 0.0
    %1445 = vmatpush.msra.mxu0 0.0
    %1446 = vmatpush.msra.mxu0 0.0
    %1447 = vmatpush.msra.mxu0 0.0
    %1448 = vmatpush.msra.mxu0 0.0
    %1449 = vmatpush.msra.mxu0 %v1429
    %1450 = vmatmul.f32.gmra.mxu0 %v1432
    %v1451 = vpop.f32.mrf.mxu0
    %v1452 = vadd.f32 0.0, %v1451
    %1453 = vdwg.mxu0
    %1454 = vrot.lane.b32.xlu0 %v1023, 64
    %v1455 = vpop.permute.xlu0 %1454
    %v1458 = vsel %vm183, %v1321, 0
    %1460 = vmatpush.msra.mxu0 0.0
    %1461 = vmatpush.msra.mxu0 0.0
    %1462 = vmatpush.msra.mxu0 0.0
    %1463 = vmatpush.msra.mxu0 0.0
    %1464 = vmatpush.msra.mxu0 0.0
    %1465 = vmatpush.msra.mxu0 0.0
    %1466 = vmatpush.msra.mxu0 0.0
    %1467 = vmatpush.msra.mxu0 0.0
    %1468 = vmatpush.msra.mxu0 0.0
    %1469 = vmatpush.msra.mxu0 0.0
    %1470 = vmatpush.msra.mxu0 0.0
    %1471 = vmatpush.msra.mxu0 0.0
    %1472 = vmatpush.msra.mxu0 0.0
    %1473 = vmatpush.msra.mxu0 0.0
    %1474 = vmatpush.msra.mxu0 0.0
    %1475 = vmatpush.msra.mxu0 %v1455
    %1476 = vmatmul.f32.gmra.mxu0 %v1458
    %v1477 = vpop.f32.mrf.mxu0
    %v1478 = vadd.f32 0.0, %v1477
    %1479 = vdwg.mxu0
    %1480 = vrot.lane.b32.xlu0 %v1025, 64
    %v1481 = vpop.permute.xlu0 %1480
    %v1484 = vsel %vm183, %v1322, 0
    %1486 = vmatpush.msra.mxu0 0.0
    %1487 = vmatpush.msra.mxu0 0.0
    %1488 = vmatpush.msra.mxu0 0.0
    %1489 = vmatpush.msra.mxu0 0.0
    %1490 = vmatpush.msra.mxu0 0.0
    %1491 = vmatpush.msra.mxu0 0.0
    %1492 = vmatpush.msra.mxu0 0.0
    %1493 = vmatpush.msra.mxu0 0.0
    %1494 = vmatpush.msra.mxu0 0.0
    %1495 = vmatpush.msra.mxu0 0.0
    %1496 = vmatpush.msra.mxu0 0.0
    %1497 = vmatpush.msra.mxu0 0.0
    %1498 = vmatpush.msra.mxu0 0.0
    %1499 = vmatpush.msra.mxu0 0.0
    %1500 = vmatpush.msra.mxu0 0.0
    %1501 = vmatpush.msra.mxu0 %v1481
    %1502 = vmatmul.f32.gmra.mxu0 %v1484
    %v1503 = vpop.f32.mrf.mxu0
    %v1504 = vadd.f32 0.0, %v1503
    %1505 = vdwg.mxu0
    %1506 = vrot.lane.b32.xlu0 %v1027, 64
    %v1507 = vpop.permute.xlu0 %1506
    %v1510 = vsel %vm183, %v1323, 0
    %1512 = vmatpush.msra.mxu0 0.0
    %1513 = vmatpush.msra.mxu0 0.0
    %1514 = vmatpush.msra.mxu0 0.0
    %1515 = vmatpush.msra.mxu0 0.0
    %1516 = vmatpush.msra.mxu0 0.0
    %1517 = vmatpush.msra.mxu0 0.0
    %1518 = vmatpush.msra.mxu0 0.0
    %1519 = vmatpush.msra.mxu0 0.0
    %1520 = vmatpush.msra.mxu0 0.0
    %1521 = vmatpush.msra.mxu0 0.0
    %1522 = vmatpush.msra.mxu0 0.0
    %1523 = vmatpush.msra.mxu0 0.0
    %1524 = vmatpush.msra.mxu0 0.0
    %1525 = vmatpush.msra.mxu0 0.0
    %1526 = vmatpush.msra.mxu0 0.0
    %1527 = vmatpush.msra.mxu0 %v1507
    %1528 = vmatmul.f32.gmra.mxu0 %v1510
    %v1529 = vpop.f32.mrf.mxu0
    %v1530 = vadd.f32 0.0, %v1529
    %1531 = vdwg.mxu0
    %1534 = vrot.lane.b32.xlu0 %v1400, 8
    %v1535 = vpop.permute.xlu0 %1534
    %1536 = vrot.lane.b32.xlu0 %v1426, 8
    %v1537 = vpop.permute.xlu0 %1536
    %1542 = vrot.lane.b32.xlu0 %v1452, 16
    %v1543 = vpop.permute.xlu0 %1542
    %1544 = vrot.lane.b32.xlu0 %v1478, 16
    %v1545 = vpop.permute.xlu0 %1544
    %1550 = vrot.lane.b32.xlu0 %v1504, 24
    %v1551 = vpop.permute.xlu0 %1550
    %1552 = vrot.lane.b32.xlu0 %v1530, 24
    %v1553 = vpop.permute.xlu0 %1552
    %v1556 = vsel %vm183, %v1348, %v1535
    %v1557 = vsel %vm183, %v1374, %v1537
    %v1558 = vsel %vm712, %v1556, %v1543
    %v1559 = vsel %vm712, %v1557, %v1545
    %v1560 = vsel %vm715, %v1558, %v1551
    %v1561 = vsel %vm715, %v1559, %v1553
    %s1562 = scalar_lea.vmem %s7, 32
    %v1563 = vld [vmem:[%s1562] sm:$0xff]
    %v1564 = vld [vmem:[%s1562 + $0x8] sm:$0xff]
    %v1565 = vld [vmem:[%s1562 + $0x10] sm:$0xff]
    %v1566 = vld [vmem:[%s1562 + $0x18] sm:$0xff]
    %v1568 = vsel %vm68, %v1560, 0
    %v1571 = vsel %vm68, %v1561, 0
    %1573 = vmatpush.msra.mxu0 0.0
    %1574 = vmatpush.msra.mxu0 0.0
    %1575 = vmatpush.msra.mxu0 0.0
    %1576 = vmatpush.msra.mxu0 0.0
    %1577 = vmatpush.msra.mxu0 0.0
    %1578 = vmatpush.msra.mxu0 0.0
    %1579 = vmatpush.msra.mxu0 0.0
    %1580 = vmatpush.msra.mxu0 0.0
    %1581 = vmatpush.msra.mxu0 0.0
    %1582 = vmatpush.msra.mxu0 0.0
    %1583 = vmatpush.msra.mxu0 0.0
    %1584 = vmatpush.msra.mxu0 0.0
    %1585 = vmatpush.msra.mxu0 %v1566
    %1586 = vmatpush.msra.mxu0 %v1565
    %1587 = vmatpush.msra.mxu0 %v1564
    %1588 = vmatpush.msra.mxu0 %v1563
    %1589 = vmatmul.f32.gmra.mxu0 %v1568
    %v1590 = vpop.f32.mrf.mxu0
    %v1591 = vadd.f32 0.0, %v1590
    %1592 = vmatmul.f32.gmra.mxu0 %v1571
    %v1593 = vpop.f32.mrf.mxu0
    %v1594 = vadd.f32 0.0, %v1593
    %1595 = vdwg.mxu0
    %v1596 = vadd.f32 %v915, %v1591
    %v1597 = vadd.f32 %v916, %v1594
    %s1598 = scalar_lea.vmem %s8, 1
    %v1599 = vld [vmem:[%s1598] sm:$0x1]
    %v1601 = vperm.slane %v1599, 0
    %v1603 = vadd.f32 %v1596, %v1601
    %v1604 = vadd.f32 %v1597, %v1601
    %s1605 = scalar_lea.vmem %s9, 1
    %v1606 = vld [vmem:[%s1605] sm:$0x1]
    %s1607 = scalar_lea.vmem %s10, 1
    %v1608 = vld [vmem:[%s1607] sm:$0x1]
    %v1609 = vsel %vm68, %v1603, 0.0
    %1610 = vadd.xlane.f32.xlu0 %v1609
    %v1611 = vpop.xlane.xlu0 %1610
    %v1612 = vsel %vm68, %v1604, 0.0
    %1613 = vadd.xlane.f32.xlu0 %v1612
    %v1614 = vpop.xlane.xlu0 %1613
    %v1615 = vmul.f32 %v1611, %v81
    %v1616 = vmul.f32 %v1614, %v81
    %v1617 = vsub.f32 %v1603, %v1615
    %v1618 = vsub.f32 %v1604, %v1616
    %v1619 = vmul.f32 %v1617, %v1617
    %v1620 = vmul.f32 %v1618, %v1618
    %v1621 = vsel %vm68, %v1619, 0.0
    %1622 = vadd.xlane.f32.xlu0 %v1621
    %v1623 = vpop.xlane.xlu0 %1622
    %v1624 = vsel %vm68, %v1620, 0.0
    %1625 = vadd.xlane.f32.xlu0 %v1624
    %v1626 = vpop.xlane.xlu0 %1625
    %v1627 = vmul.f32 %v1623, %v81
    %v1628 = vmul.f32 %v1626, %v81
    %v1629 = vadd.f32 %v1627, 1e-05
    %v1630 = vadd.f32 %v1628, 1e-05
    %v1631 = vrsqrt.pop %v1629
    %v1632 = vmul.f32 %v1631, %v1629
    %v1633 = vmul.f32 %v1632, %v1631
    %v1634 = vmul.f32 0.5, %v1633
    %v1635 = vsub.f32 1.5, %v1634
    %v1636 = vmul.f32 %v1631, %v1635
    %vm1637 = vweird.f32 %v1629
    %vm1638 = vweird.f32 %v1631
    %vm1639 = vmor %vm1637, %vm1638
    %v1640 = vsel %vm1639, %v1631, %v1636
    %v1641 = vrsqrt.pop %v1630
    %v1642 = vmul.f32 %v1641, %v1630
    %v1643 = vmul.f32 %v1642, %v1641
    %v1644 = vmul.f32 0.5, %v1643
    %v1645 = vsub.f32 1.5, %v1644
    %v1646 = vmul.f32 %v1641, %v1645
    %vm1647 = vweird.f32 %v1630
    %vm1648 = vweird.f32 %v1641
    %vm1649 = vmor %vm1647, %vm1648
    %v1650 = vsel %vm1649, %v1641, %v1646
    %v1651 = vmul.f32 %v1617, %v1640
    %v1652 = vmul.f32 %v1618, %v1650
    %v1654 = vperm.slane %v1606, 0
    %v1656 = vmul.f32 %v1651, %v1654
    %v1657 = vmul.f32 %v1652, %v1654
    %v1659 = vperm.slane %v1608, 0
    %v1661 = vadd.f32 %v1656, %v1659
    %v1662 = vadd.f32 %v1657, %v1659
    %s1663 = scalar_lea.vmem %s11, 32
    %v1664 = vld [vmem:[%s1663] sm:$0xff]
    %v1665 = vld [vmem:[%s1663 + $0x8] sm:$0xff]
    %v1666 = vld [vmem:[%s1663 + $0x10] sm:$0xff]
    %v1667 = vld [vmem:[%s1663 + $0x18] sm:$0xff]
    %s1668 = scalar_lea.vmem %s12, 1
    %v1669 = vld [vmem:[%s1668] sm:$0x1]
    %v1671 = vperm.slane %v1669, 0
    %v1674 = vsel %vm68, %v1661, 0
    %v1677 = vsel %vm68, %v1662, 0
    %1679 = vmatpush.msra.mxu0 0.0
    %1680 = vmatpush.msra.mxu0 0.0
    %1681 = vmatpush.msra.mxu0 0.0
    %1682 = vmatpush.msra.mxu0 0.0
    %1683 = vmatpush.msra.mxu0 0.0
    %1684 = vmatpush.msra.mxu0 0.0
    %1685 = vmatpush.msra.mxu0 0.0
    %1686 = vmatpush.msra.mxu0 0.0
    %1687 = vmatpush.msra.mxu0 0.0
    %1688 = vmatpush.msra.mxu0 0.0
    %1689 = vmatpush.msra.mxu0 0.0
    %1690 = vmatpush.msra.mxu0 0.0
    %1691 = vmatpush.msra.mxu0 %v1667
    %1692 = vmatpush.msra.mxu0 %v1666
    %1693 = vmatpush.msra.mxu0 %v1665
    %1694 = vmatpush.msra.mxu0 %v1664
    %1695 = vmatmul.f32.gmra.mxu0 %v1674
    %v1696 = vpop.f32.mrf.mxu0
    %v1697 = vadd.f32 %v1671, %v1696
    %1698 = vmatmul.f32.gmra.mxu0 %v1677
    %v1699 = vpop.f32.mrf.mxu0
    %v1700 = vadd.f32 %v1671, %v1699
    %1701 = vdwg.mxu0
    %v1702 = vmul.f32 %v1697, %v1697
    %v1703 = vmul.f32 %v1700, %v1700
    %v1704 = vmul.f32 %v1697, %v1702
    %v1705 = vmul.f32 %v1700, %v1703
    %v1706 = vmul.f32 %v1704, 0.044715
    %v1707 = vmul.f32 %v1705, 0.044715
    %v1708 = vadd.f32 %v1697, %v1706
    %v1709 = vadd.f32 %v1700, %v1707
    %v1710 = vmul.f32 %v1708, 0.7978846
    %v1711 = vmul.f32 %v1709, 0.7978846
    %v1712 = vtanh.pop %v1710
    %v1713 = vtanh.pop %v1711
    %v1714 = vadd.f32 %v1712, 1.0
    %v1715 = vadd.f32 %v1713, 1.0
    %v1716 = vmul.f32 %v1714, 0.5
    %v1717 = vmul.f32 %v1715, 0.5
    %v1718 = vmul.f32 %v1697, %v1716
    %v1719 = vmul.f32 %v1700, %v1717
    %s1720 = scalar_lea.vmem %s13, 128
    %v1721 = vld [vmem:[%s1720] sm:$0xff]
    %v1722 = vld [vmem:[%s1720 + $0x8] sm:$0xff]
    %v1723 = vld [vmem:[%s1720 + $0x10] sm:$0xff]
    %v1724 = vld [vmem:[%s1720 + $0x18] sm:$0xff]
    %v1725 = vld [vmem:[%s1720 + $0x20] sm:$0xff]
    %v1726 = vld [vmem:[%s1720 + $0x28] sm:$0xff]
    %v1727 = vld [vmem:[%s1720 + $0x30] sm:$0xff]
    %v1728 = vld [vmem:[%s1720 + $0x38] sm:$0xff]
    %v1729 = vld [vmem:[%s1720 + $0x40] sm:$0xff]
    %v1730 = vld [vmem:[%s1720 + $0x48] sm:$0xff]
    %v1731 = vld [vmem:[%s1720 + $0x50] sm:$0xff]
    %v1732 = vld [vmem:[%s1720 + $0x58] sm:$0xff]
    %v1733 = vld [vmem:[%s1720 + $0x60] sm:$0xff]
    %v1734 = vld [vmem:[%s1720 + $0x68] sm:$0xff]
    %v1735 = vld [vmem:[%s1720 + $0x70] sm:$0xff]
    %v1736 = vld [vmem:[%s1720 + $0x78] sm:$0xff]
    %1737 = vmatpush.msra.mxu0 %v1736
    %1738 = vmatpush.msra.mxu0 %v1735
    %1739 = vmatpush.msra.mxu0 %v1734
    %1740 = vmatpush.msra.mxu0 %v1733
    %1741 = vmatpush.msra.mxu0 %v1732
    %1742 = vmatpush.msra.mxu0 %v1731
    %1743 = vmatpush.msra.mxu0 %v1730
    %1744 = vmatpush.msra.mxu0 %v1729
    %1745 = vmatpush.msra.mxu0 %v1728
    %1746 = vmatpush.msra.mxu0 %v1727
    %1747 = vmatpush.msra.mxu0 %v1726
    %1748 = vmatpush.msra.mxu0 %v1725
    %1749 = vmatpush.msra.mxu0 %v1724
    %1750 = vmatpush.msra.mxu0 %v1723
    %1751 = vmatpush.msra.mxu0 %v1722
    %1752 = vmatpush.msra.mxu0 %v1721
    %1753 = vmatmul.f32.gmra.mxu0 %v1718
    %v1754 = vpop.f32.mrf.mxu0
    %v1755 = vadd.f32 0.0, %v1754
    %1756 = vmatmul.f32.gmra.mxu0 %v1719
    %v1757 = vpop.f32.mrf.mxu0
    %v1758 = vadd.f32 0.0, %v1757
    %1759 = vdwg.mxu0
    %v1760 = vadd.f32 %v1603, %v1755
    %v1761 = vadd.f32 %v1604, %v1758
    %s1762 = scalar_lea.vmem %s14, 1
    %v1763 = vld [vmem:[%s1762] sm:$0x1]
    %v1765 = vperm.slane %v1763, 0
    %v1767 = vadd.f32 %v1760, %v1765
    %v1768 = vadd.f32 %v1761, %v1765
    %v1769 = vld [vmem:[%s2] sm:$0x3]
    %v1771 = vsel %vm712, %v1769, 0
    %1773 = vmatpush.msra.mxu0 0.0
    %1774 = vmatpush.msra.mxu0 0.0
    %1775 = vmatpush.msra.mxu0 0.0
    %1776 = vmatpush.msra.mxu0 0.0
    %1777 = vmatpush.msra.mxu0 0.0
    %1778 = vmatpush.msra.mxu0 0.0
    %1779 = vmatpush.msra.mxu0 0.0
    %1780 = vmatpush.msra.mxu0 0.0
    %1781 = vmatpush.msra.mxu0 0.0
    %1782 = vmatpush.msra.mxu0 0.0
    %1783 = vmatpush.msra.mxu0 0.0
    %1784 = vmatpush.msra.mxu0 0.0
    %1785 = vmatpush.msra.mxu0 0.0
    %1786 = vmatpush.msra.mxu0 0.0
    %1787 = vmatpush.msra.mxu0 %v1768
    %1788 = vmatpush.msra.mxu0 %v1767
    %1789 = vmatmul.f32.gmra.mxu0 %v1771
    %v1790 = vpop.f32.mrf.mxu0
    %v1791 = vadd.f32 0.0, %v1790
    %1792 = vdwg.mxu0
    %v1793 = vld [vmem:[%s15] sm:$0x1]
    %v1794 = vld [vmem:[%s16] sm:$0x1]
    %vm1795 = vcmask 254976
    %v1796 = vsel %vm1795, %v1791, 0.0
    %1797 = vadd.xlane.f32.xlu0 %v1796
    %v1798 = vpop.xlane.xlu0 %1797
    %v1799 = vmul.f32 %v1798, %v81
    %v1800 = vsub.f32 %v1791, %v1799
    %v1801 = vmul.f32 %v1800, %v1800
    %v1802 = vsel %vm1795, %v1801, 0.0
    %1803 = vadd.xlane.f32.xlu0 %v1802
    %v1804 = vpop.xlane.xlu0 %1803
    %v1805 = vmul.f32 %v1804, %v81
    %v1806 = vadd.f32 %v1805, 1e-05
    %v1807 = vrsqrt.pop %v1806
    %v1808 = vmul.f32 %v1807, %v1806
    %v1809 = vmul.f32 %v1808, %v1807
    %v1810 = vmul.f32 0.5, %v1809
    %v1811 = vsub.f32 1.5, %v1810
    %v1812 = vmul.f32 %v1807, %v1811
    %vm1813 = vweird.f32 %v1806
    %vm1814 = vweird.f32 %v1807
    %vm1815 = vmor %vm1813, %vm1814
    %v1816 = vsel %vm1815, %v1807, %v1812
    %v1817 = vmul.f32 %v1800, %v1816
    %v1819 = vperm.slane %v1793, 0
    %v1821 = vmul.f32 %v1817, %v1819
    %v1823 = vperm.slane %v1794, 0
    %v1825 = vadd.f32 %v1821, %v1823
    %v1826 = vld [vmem:[%s17] sm:$0xff]
    %v1827 = vld [vmem:[%s17 + $0x8] sm:$0xff]
    %v1828 = vld [vmem:[%s17 + $0x10] sm:$0xff]
    %v1829 = vld [vmem:[%s17 + $0x18] sm:$0xff]
    %v1830 = vld [vmem:[%s18] sm:$0x1]
    %v1832 = vperm.slane %v1830, 0
    %v1835 = vsel %vm68, %v1825, 0
    %1837 = vmatpush.msra.mxu0 0.0
    %1838 = vmatpush.msra.mxu0 0.0
    %1839 = vmatpush.msra.mxu0 0.0
    %1840 = vmatpush.msra.mxu0 0.0
    %1841 = vmatpush.msra.mxu0 0.0
    %1842 = vmatpush.msra.mxu0 0.0
    %1843 = vmatpush.msra.mxu0 0.0
    %1844 = vmatpush.msra.mxu0 0.0
    %1845 = vmatpush.msra.mxu0 0.0
    %1846 = vmatpush.msra.mxu0 0.0
    %1847 = vmatpush.msra.mxu0 0.0
    %1848 = vmatpush.msra.mxu0 0.0
    %1849 = vmatpush.msra.mxu0 %v1829
    %1850 = vmatpush.msra.mxu0 %v1828
    %1851 = vmatpush.msra.mxu0 %v1827
    %1852 = vmatpush.msra.mxu0 %v1826
    %1853 = vmatmul.f32.gmra.mxu0 %v1835
    %v1854 = vpop.f32.mrf.mxu0
    %v1855 = vadd.f32 %v1832, %v1854
    %1856 = vdwg.mxu0
    %vm1857 = vcmask 9216
    %1858 = vst.msk [vmem:[#allocation2] sm:$0x3] %vm1857, %v1855
    // Predicated region
    $region78: #{tpu_custom_call.1} parent=1 // pred_check
      _
    $region79: #{tpu_custom_call.1} parent=1 // pred_check_branch
      %1860 = sbr.rel (0) target = $region81
    $region80: #{tpu_custom_call.1} parent=1 // pred_region
      %1862 = vsyncadd [#allocation3], 0
      %s1864 = sshll.u32 [#allocation2], 4
      %s1865 = int_to_ptr.vmem [resolvable:$true] %s1864
      %s1866 = sshll.u32 %s19, 4
      %s1867 = int_to_ptr.hbm [resolvable:$true] %s1866
      %1869 = dma.vmem_to_hbm [thread:$0]  %s1865, 32, %s1867, [#allocation3]
    $region81: #{tpu_custom_call.1} parent=1 // pred_fallthru
      _
    // Predicated region
    $region82: #{tpu_custom_call.1} parent=1 // pred_check
      _
    $region83: #{tpu_custom_call.1} parent=1 // pred_check_branch
      %1871 = sbr.rel (0) target = $region85
    $region84: #{tpu_custom_call.1} parent=1 // pred_region
      %1873 = dma.done [#allocation3], 32
    $region85: #{tpu_custom_call.1} parent=1 // pred_fallthru
      _
    %1874 = vsyncpa [#allocation3], 1

</llo_original>
